<compile_context>
chip_gen: v7x
topology: tpu7x:2x2x1
jax: 0.10.0
libtpu: 0.0.40
codegen_flags: <defaults>
</compile_context>

<pallas_src>
import jax
import jax.numpy as jnp
from jax import lax
from jax.experimental import pallas as pl
from jax.experimental.pallas import tpu as pltpu


# ---------------------------------------------------------------------------------
# Kernel 2: fused RMSNorm + SwiGLU FFN + residual
#   out = x + ( silu(rmsnorm(x) @ w1) * (rmsnorm(x) @ w3) ) @ w2
# ---------------------------------------------------------------------------------
def swiglu_ffn_fused(x, norm_w, w1, w3, w2, *, eps=1e-5, tm=256, tf=512,
                     vmem_limit_bytes=None):
    """Per-generation tuning knobs (see review):
       v6e / v5e : tm=512, vmem_limit_bytes≈96MB (halves per-row-tile weight refetch)
       v7x       : tm=256, tf=256, vmem_limit_bytes≈40MB (64 MiB physical VMEM)"""
    M, D = x.shape
    F = w1.shape[1]
    tm = min(tm, M)
    tf = min(tf, F)
    assert M % tm == 0 and tm % 8 == 0, "token tile must divide M and be a multiple of 8"
    assert F % tf == 0 and tf % 128 == 0, "ffn tile must divide F and be a multiple of 128"
    assert D % 128 == 0

    # bf16 operands for the MXU (f32 accumulation inside the kernel).
    w1b = w1.astype(jnp.bfloat16)
    w3b = w3.astype(jnp.bfloat16)
    w2b = w2.astype(jnp.bfloat16)
    nf = F // tf
    # Chunk-interleaved [w1_chunk | w3_chunk] so each (D, 2*tf) block carries the
    # matching gate/up columns -> one matmul per f-step instead of two.
    w13 = jnp.concatenate([w1b.reshape(D, nf, tf), w3b.reshape(D, nf, tf)],
                          axis=2).reshape(D, 2 * F)
    wn = norm_w.reshape(1, D).astype(jnp.float32)

    def kernel(x_ref, wn_ref, w13_ref, w2_ref, o_ref, xb_ref, acc_ref):
        f = pl.program_id(1)

        @pl.when(f == 0)
        def _():
            xf = x_ref[...].astype(jnp.float32)
            var = jnp.mean(xf * xf, axis=-1, keepdims=True)
            xn = xf * lax.rsqrt(var + eps) * wn_ref[...]
            xb_ref[...] = xn.astype(jnp.bfloat16)   # normalized activations, bf16
            acc_ref[...] = xf                       # residual-initialised accumulator

        xb = xb_ref[...]
        gu = jnp.dot(xb, w13_ref[...], preferred_element_type=jnp.float32)  # (tm, 2*tf)
        g = gu[:, :tf]
        u = gu[:, tf:]
        h = g * jax.nn.sigmoid(g) * u               # SwiGLU elementwise kept in f32
        acc_ref[...] += jnp.dot(h.astype(jnp.bfloat16), w2_ref[...],
                                preferred_element_type=jnp.float32)

        @pl.when(f == pl.num_programs(1) - 1)
        def _():
            o_ref[...] = acc_ref[...].astype(o_ref.dtype)

    n_row_tiles = M // tm
    flops = 6 * M * D * F + 8 * M * F
    bytes_accessed = (2 * M * D * 4                                   # x in + out (f32)
                      + n_row_tiles * (2 * D * F * 2 + F * D * 2)     # w13 + w2 (bf16) re-fetched per row tile
                      + D * 4)
    cost = pl.CostEstimate(flops=flops, transcendentals=M * F,
                           bytes_accessed=bytes_accessed)

    return pl.pallas_call(
        kernel,
        out_shape=jax.ShapeDtypeStruct((M, D), jnp.float32),
        grid_spec=pltpu.PrefetchScalarGridSpec(
            num_scalar_prefetch=0,
            grid=(n_row_tiles, nf),                            # reduction axis (F) last
            in_specs=[
                pl.BlockSpec((tm, D), lambda i, f: (i, 0)),        # full-K x slab (one DMA per row tile)
                pl.BlockSpec((1, D), lambda i, f: (0, 0)),         # rmsnorm weight
                pl.BlockSpec((D, 2 * tf), lambda i, f: (0, f)),    # fused [w1|w3] chunk
                pl.BlockSpec((tf, D), lambda i, f: (f, 0)),        # w2 chunk
            ],
            out_specs=pl.BlockSpec((tm, D), lambda i, f: (i, 0)),
            scratch_shapes=[
                pltpu.VMEM((tm, D), jnp.bfloat16),   # rmsnorm(x) in bf16
                pltpu.VMEM((tm, D), jnp.float32),    # residual + output accumulator
            ],
        ),
        compiler_params=pltpu.CompilerParams(
            dimension_semantics=("parallel", "arbitrary"),
            vmem_limit_bytes=vmem_limit_bytes,
        ),
        cost_estimate=cost,
    )(x, wn, w13, w2b)


# ---------------------------------------------------------------------------------
# Kernel 1: fused RMSNorm + multi-head attention (RoPE, causal, GQA) + out-proj
#           + residual, tiled over query rows.
# ---------------------------------------------------------------------------------
def attention_block_fused(x, norm_w, wq, wk, wv, wo, *, rope_theta=500000.0, eps=1e-5,
                          tq=256, vmem_limit_bytes=None):
    S, D = x.shape
    n_heads, head_dim, _ = wq.shape
    n_kv_heads, kv_head_dim, _ = wk.shape
    assert n_heads % n_kv_heads == 0
    # GQA group size. The PyTorch module hard-codes `head // 4`, which equals
    # `head // group` for its only valid configuration (n_heads == 4 * n_kv_heads).
    group = n_heads // n_kv_heads
    assert head_dim == kv_head_dim and head_dim % 8 == 0 and head_dim % 2 == 0
    assert S % 8 == 0 and D % 128 == 0
    tq = min(tq, S)
    assert S % tq == 0 and tq % 8 == 0

    # RoPE tables.  The PyTorch module hard-codes 64 frequencies (head_dim=128);
    # here it is head_dim // 2 in general.
    half = head_dim // 2
    freqs = 1.0 / (rope_theta ** (jnp.arange(half, dtype=jnp.float32) / half))
    ang = jnp.outer(jnp.arange(S, dtype=jnp.float32), freqs)          # (S, half)
    cos = jnp.repeat(jnp.cos(ang), 2, axis=1)                         # (S, head_dim)
    sign = jnp.tile(jnp.array([-1.0, 1.0], jnp.float32), half)
    sin = jnp.repeat(jnp.sin(ang), 2, axis=1) * sign                  # (S, head_dim)
    idx = jnp.arange(head_dim)
    swap = jnp.zeros((head_dim, head_dim), jnp.float32).at[idx, idx ^ 1].set(1.0)

    # bf16 MXU operands (f32 accumulation inside the kernel).
    wqb = wq.astype(jnp.bfloat16)
    wkb = wk.astype(jnp.bfloat16)
    wvb = wv.astype(jnp.bfloat16)
    wot = wo.T.astype(jnp.bfloat16)                                   # (D, D)
    wn = norm_w.reshape(1, D).astype(jnp.float32)
    scale = 1.0 / float(head_dim) ** 0.5

    def kernel(x_ref, wn_ref, wq_ref, wk_ref, wv_ref, wot_ref,
               cos_ref, sin_ref, swap_ref, o_ref, xn_ref, acc_ref):
        kh = pl.program_id(1)
        q0 = pl.multiple_of(pl.program_id(0) * tq, tq)

        @pl.when(kh == 0)
        def _():
            xf = x_ref[...].astype(jnp.float32)
            var = jnp.mean(xf * xf, axis=-1, keepdims=True)
            xn_ref[...] = (xf * lax.rsqrt(var + eps) * wn_ref[...]).astype(jnp.bfloat16)
            acc_ref[...] = x_ref[pl.ds(q0, tq), :].astype(jnp.float32)   # residual init

        xn_full = xn_ref[...]                       # (S, D)  bf16 (for K/V)
        xn_q = xn_ref[pl.ds(q0, tq), :]             # (tq, D) bf16 (for Q)
        sw = swap_ref[...]
        cos_k, sin_k = cos_ref[...], sin_ref[...]
        cos_q = cos_ref[pl.ds(q0, tq), :]
        sin_q = sin_ref[pl.ds(q0, tq), :]

        dn = (((1,), (1,)), ((), ()))               # A @ B.T

        def rope(t, c, s):  # interleaved-pair rotation via a tiny pair-swap matmul (f32)
            return t * c + jnp.dot(t, sw, preferred_element_type=jnp.float32) * s

        # K / V for this kv head: computed ONCE for the whole group of query heads.
        k = lax.dot_general(xn_full, wk_ref[0], dn, preferred_element_type=jnp.float32)
        v = lax.dot_general(xn_full, wv_ref[0], dn, preferred_element_type=jnp.float32)
        kb = rope(k, cos_k, sin_k).astype(jnp.bfloat16)                # (S, hd)
        vb = v.astype(jnp.bfloat16)                                    # (S, hd)

        row = q0 + lax.broadcasted_iota(jnp.int32, (tq, S), 0)
        col = lax.broadcasted_iota(jnp.int32, (tq, S), 1)

        attn_heads = []
        for g in range(group):                      # static unroll over the kv group
            q = lax.dot_general(xn_q, wq_ref[g], dn, preferred_element_type=jnp.float32)
            qb = rope(q, cos_q, sin_q).astype(jnp.bfloat16)            # (tq, hd)
            s = lax.dot_general(qb, kb, dn, preferred_element_type=jnp.float32) * scale
            s = jnp.where(col > row, -jnp.inf, s)                      # causal mask
            m = jnp.max(s, axis=-1, keepdims=True)
            p = jnp.exp(s - m)
            p = p * pl.reciprocal(jnp.sum(p, axis=-1, keepdims=True), approx=True)
            attn_heads.append(jnp.dot(p.astype(jnp.bfloat16), vb,
                                      preferred_element_type=jnp.float32))  # (tq, hd)

        # One (tq, group*hd) @ (group*hd, D) matmul per kv head instead of `group`
        # small K=hd matmuls; accumulate into the residual-initialised f32 slab.
        cat = jnp.concatenate(attn_heads, axis=-1).astype(jnp.bfloat16)
        acc_ref[...] += jnp.dot(cat, wot_ref[...], preferred_element_type=jnp.float32)

        @pl.when(kh == pl.num_programs(1) - 1)
        def _():
            o_ref[...] = acc_ref[...].astype(o_ref.dtype)

    n_q_tiles = S // tq
    flops = (n_q_tiles * n_kv_heads * 4 * S * D * head_dim     # K,V proj (recomputed per q tile)
             + 2 * S * D * head_dim * n_heads                  # Q proj
             + 4 * S * S * head_dim * n_heads                  # scores + P@V
             + 2 * S * D * D)                                  # out projection
    bytes_accessed = (2 * S * D * 4
                      + n_q_tiles * ((n_heads + 2 * n_kv_heads) * head_dim * D * 2
                                     + D * D * 2)
                      + 2 * S * head_dim * 4 + head_dim * head_dim * 4 + D * 4)
    cost = pl.CostEstimate(flops=flops, transcendentals=n_heads * S * S,
                           bytes_accessed=bytes_accessed)

    return pl.pallas_call(
        kernel,
        out_shape=jax.ShapeDtypeStruct((S, D), jnp.float32),
        grid_spec=pltpu.PrefetchScalarGridSpec(
            num_scalar_prefetch=0,
            grid=(n_q_tiles, n_kv_heads),            # q tiles parallel, kv heads inner
            in_specs=[
                pl.BlockSpec((S, D), lambda qi, kh: (0, 0)),                  # x (resident)
                pl.BlockSpec((1, D), lambda qi, kh: (0, 0)),                  # rmsnorm weight
                pl.BlockSpec((group, head_dim, D), lambda qi, kh: (kh, 0, 0)),  # wq group
                pl.BlockSpec((1, head_dim, D), lambda qi, kh: (kh, 0, 0)),      # wk[kh]
                pl.BlockSpec((1, head_dim, D), lambda qi, kh: (kh, 0, 0)),      # wv[kh]
                pl.BlockSpec((group * head_dim, D), lambda qi, kh: (kh, 0)),    # wo.T rows for this kv group
                pl.BlockSpec((S, head_dim), lambda qi, kh: (0, 0)),             # cos table
                pl.BlockSpec((S, head_dim), lambda qi, kh: (0, 0)),             # sin table (pair-signed)
                pl.BlockSpec((head_dim, head_dim), lambda qi, kh: (0, 0)),      # pair-swap matrix
            ],
            out_specs=pl.BlockSpec((tq, D), lambda qi, kh: (qi, 0)),
            scratch_shapes=[
                pltpu.VMEM((S, D), jnp.bfloat16),    # rmsnorm(x), computed at kh==0
                pltpu.VMEM((tq, D), jnp.float32),    # residual + output accumulator
            ],
        ),
        compiler_params=pltpu.CompilerParams(
            dimension_semantics=("parallel", "arbitrary"),
            vmem_limit_bytes=vmem_limit_bytes,
        ),
        cost_estimate=cost,
    )(x, wn, wqb, wkb, wvb, wot, cos, sin, swap)


# ---------------------------------------------------------------------------------
# Full layer
# ---------------------------------------------------------------------------------
def llama3_layer(x, params, *, rope_theta=500000.0, eps=1e-5,
                 attn_tq=256, ffn_tm=256, ffn_tf=512):
    emb_after_edit = attention_block_fused(
        x, params["norm1_w"], params["wq"], params["wk"], params["wv"], params["wo"],
        rope_theta=rope_theta, eps=eps, tq=attn_tq)
    return swiglu_ffn_fused(
        emb_after_edit, params["norm2_w"], params["w1"], params["w3"], params["w2"],
        eps=eps, tm=ffn_tm, tf=ffn_tf)


# ---------------------------------------------------------------------------------
# Pure-JAX reference (mirrors the PyTorch module; it also mirrors the kernels'
# bf16-operand / f32-accumulate MXU numerics so tolerances stay tight).
# ---------------------------------------------------------------------------------
def reference_layer(x, params, *, rope_theta=500000.0, eps=1e-5):
    def rms(h, w):
        var = jnp.mean(h * h, axis=-1, keepdims=True)
        return h * lax.rsqrt(var + eps) * w

    S, D = x.shape
    wq, wk, wv, wo = params["wq"], params["wk"], params["wv"], params["wo"]
    n_heads, head_dim, _ = wq.shape
    n_kv_heads = wk.shape[0]
    group = n_heads // n_kv_heads
    half = head_dim // 2
    freqs = 1.0 / (rope_theta ** (jnp.arange(half, dtype=jnp.float32) / half))
    ang = jnp.outer(jnp.arange(S, dtype=jnp.float32), freqs)  # (S, half)
    c, s_ = jnp.cos(ang), jnp.sin(ang)

    xn = rms(x, params["norm1_w"]).astype(jnp.bfloat16)
    wqb, wkb, wvb = (wq.astype(jnp.bfloat16), wk.astype(jnp.bfloat16),
                     wv.astype(jnp.bfloat16))
    wob = wo.astype(jnp.bfloat16)
    heads = []
    for h in range(n_heads):
        q = jnp.dot(xn, wqb[h].T, preferred_element_type=jnp.float32)
        k = jnp.dot(xn, wkb[h // group].T, preferred_element_type=jnp.float32)
        v = jnp.dot(xn, wvb[h // group].T, preferred_element_type=jnp.float32)

        def rot(t):  # == torch.as_complex(pairs) * torch.polar(cos, sin)
            tp = t.reshape(S, -1, 2)
            a, b = tp[..., 0], tp[..., 1]
            return jnp.stack([a * c - b * s_, a * s_ + b * c], axis=-1).reshape(S, -1)

        qr = rot(q).astype(jnp.bfloat16)
        kr = rot(k).astype(jnp.bfloat16)
        sc = jnp.dot(qr, kr.T, preferred_element_type=jnp.float32) / (head_dim ** 0.5)
        mask = jnp.triu(jnp.full((S, S), -jnp.inf, dtype=jnp.float32), k=1)
        att = jax.nn.softmax(sc + mask, axis=-1)
        heads.append(jnp.dot(att.astype(jnp.bfloat16), v.astype(jnp.bfloat16),
                             preferred_element_type=jnp.float32))
    cat = jnp.concatenate(heads, axis=-1).astype(jnp.bfloat16)
    emb = x + jnp.dot(cat, wob.T, preferred_element_type=jnp.float32)

    xn2 = rms(emb, params["norm2_w"]).astype(jnp.bfloat16)
    w1b = params["w1"].astype(jnp.bfloat16)
    w3b = params["w3"].astype(jnp.bfloat16)
    w2b = params["w2"].astype(jnp.bfloat16)
    g = jnp.dot(xn2, w1b, preferred_element_type=jnp.float32)
    u = jnp.dot(xn2, w3b, preferred_element_type=jnp.float32)
    hcur = (g * jax.nn.sigmoid(g) * u).astype(jnp.bfloat16)
    return emb + jnp.dot(hcur, w2b, preferred_element_type=jnp.float32)


if __name__ == "__main__":
    # Small stand-ins for the real config (dim=4096, n_heads=32, n_kv_heads=8,
    # d_ff=14336): keep n_heads == 4 * n_kv_heads so the module's hard-coded
    # head//4 GQA mapping and kv_head_dim == head_dim both hold.
    dim, n_heads, n_kv_heads, seq, d_ff = 128, 8, 2, 32, 1024
    head_dim = dim // n_heads                    # 16
    kv_head_dim = dim // 4 // n_kv_heads         # 16
    assert head_dim == kv_head_dim and n_heads == 4 * n_kv_heads

    key = jax.random.PRNGKey(0)
    ks = jax.random.split(key, 10)
    s = 1.0 / float(dim) ** 0.5
    params = dict(
        norm1_w=1.0 + 0.1 * jax.random.normal(ks[0], (dim,), jnp.float32),
        norm2_w=1.0 + 0.1 * jax.random.normal(ks[1], (dim,), jnp.float32),
        wq=jax.random.normal(ks[2], (n_heads, head_dim, dim), jnp.float32) * s,
        wk=jax.random.normal(ks[3], (n_kv_heads, kv_head_dim, dim), jnp.float32) * s,
        wv=jax.random.normal(ks[4], (n_kv_heads, kv_head_dim, dim), jnp.float32) * s,
        wo=jax.random.normal(ks[5], (dim, dim), jnp.float32) * s,
        w1=jax.random.normal(ks[6], (dim, d_ff), jnp.float32) * s,
        w3=jax.random.normal(ks[7], (dim, d_ff), jnp.float32) * s,
        w2=jax.random.normal(ks[8], (d_ff, dim), jnp.float32) * (1.0 / float(d_ff) ** 0.5),
    )
    x = jax.random.normal(ks[9], (seq, dim), jnp.float32)

    # Small tiles only to exercise multiple q-tiles / row-tiles at toy scale;
    # production defaults are attn_tq=256, ffn_tm=256..512, ffn_tf=256..512.
    out = llama3_layer(x, params, attn_tq=16, ffn_tm=16, ffn_tf=512)
    out = jax.block_until_ready(out)

    ref = reference_layer(x, params)
    assert out.shape == (seq, dim)
    assert bool(jnp.allclose(out, ref, atol=2e-2, rtol=2e-2)), (
        "max abs err = %f" % float(jnp.max(jnp.abs(out - ref))))

    print("KERNEL_OK")
</pallas_src>

<mosaic_0001>
module attributes {stable_mosaic.version = 11 : i64} {
  func.func @kernel(%arg0: i32, %arg1: i32, %arg2: memref<32x128xf32, #tpu.memory_space<vmem>>, %arg3: memref<1x128xf32, #tpu.memory_space<vmem>>, %arg4: memref<4x16x128xbf16, #tpu.memory_space<vmem>>, %arg5: memref<1x16x128xbf16, #tpu.memory_space<vmem>>, %arg6: memref<1x16x128xbf16, #tpu.memory_space<vmem>>, %arg7: memref<64x128xbf16, #tpu.memory_space<vmem>>, %arg8: memref<32x16xf32, #tpu.memory_space<vmem>>, %arg9: memref<32x16xf32, #tpu.memory_space<vmem>>, %arg10: memref<16x16xf32, #tpu.memory_space<vmem>>, %arg11: memref<16x128xf32, #tpu.memory_space<vmem>>, %arg12: memref<32x128xbf16, #tpu.memory_space<vmem>>, %arg13: memref<16x128xf32, #tpu.memory_space<vmem>>) attributes {dimension_semantics = [#tpu.dimension_semantics<parallel>, #tpu.dimension_semantics<arbitrary>], iteration_bounds = array<i64: 2, 2>, scalar_prefetch = 0 : i64, scratch_operands = 2 : i64, tpu.core_type = #tpu.core_type<tc>, window_params = [{pipeline_mode = #tpu.pipeline_mode<synchronous>, transform_indices = @transform_0, window_bounds = array<i64: 32, 128>}, {pipeline_mode = #tpu.pipeline_mode<synchronous>, transform_indices = @transform_1, window_bounds = array<i64: 1, 128>}, {transform_indices = @transform_2, window_bounds = array<i64: 4, 16, 128>}, {transform_indices = @transform_3, window_bounds = array<i64: 1, 16, 128>}, {transform_indices = @transform_4, window_bounds = array<i64: 1, 16, 128>}, {transform_indices = @transform_5, window_bounds = array<i64: 64, 128>}, {pipeline_mode = #tpu.pipeline_mode<synchronous>, transform_indices = @transform_6, window_bounds = array<i64: 32, 16>}, {pipeline_mode = #tpu.pipeline_mode<synchronous>, transform_indices = @transform_7, window_bounds = array<i64: 32, 16>}, {pipeline_mode = #tpu.pipeline_mode<synchronous>, transform_indices = @transform_8, window_bounds = array<i64: 16, 16>}, {transform_indices = @transform_9, window_bounds = array<i64: 16, 128>}]} {
    %c16_i32 = arith.constant 16 : i32
    %0 = arith.muli %arg0, %c16_i32 : i32
    %1 = tpu.assume_multiple %0, 16 : i32
    %c0_i32 = arith.constant 0 : i32
    %2 = arith.cmpi eq, %arg1, %c0_i32 : i32
    %3 = arith.extui %2 : i1 to i32
    %c0_i32_0 = arith.constant 0 : i32
    %4 = arith.cmpi ne, %3, %c0_i32_0 : i32
    scf.if %4 {
      %c0_68 = arith.constant 0 : index
      %c0_69 = arith.constant 0 : index
      %145 = vector.load %arg2[%c0_68, %c0_69] : memref<32x128xf32, #tpu.memory_space<vmem>>, vector<32x128xf32>
      %146 = arith.mulf %145, %145 : vector<32x128xf32>
      %cst_70 = arith.constant dense<0.000000e+00> : vector<32xf32>
      %147 = vector.multi_reduction <add>, %146, %cst_70 [1] : vector<32x128xf32> to vector<32xf32>
      %148 = vector.shape_cast %147 : vector<32xf32> to vector<32x1xf32>
      %cst_71 = arith.constant 1.280000e+02 : f32
      %149 = vector.broadcast %cst_71 : f32 to vector<32x1xf32>
      %150 = arith.divf %148, %149 : vector<32x1xf32>
      %cst_72 = arith.constant 9.99999974E-6 : f32
      %151 = vector.broadcast %cst_72 : f32 to vector<32x1xf32>
      %152 = arith.addf %150, %151 : vector<32x1xf32>
      %153 = math.rsqrt %152 : vector<32x1xf32>
      %154 = vector.broadcast %153 : vector<32x1xf32> to vector<32x128xf32>
      %155 = arith.mulf %145, %154 : vector<32x128xf32>
      %c0_73 = arith.constant 0 : index
      %c0_74 = arith.constant 0 : index
      %156 = vector.load %arg3[%c0_73, %c0_74] : memref<1x128xf32, #tpu.memory_space<vmem>>, vector<1x128xf32>
      %157 = vector.broadcast %156 : vector<1x128xf32> to vector<32x128xf32>
      %158 = arith.mulf %155, %157 : vector<32x128xf32>
      %159 = arith.truncf %158 : vector<32x128xf32> to vector<32x128xbf16>
      %c0_75 = arith.constant 0 : index
      %c0_76 = arith.constant 0 : index
      %160 = vector.load %arg12[%c0_75, %c0_76] : memref<32x128xbf16, #tpu.memory_space<vmem>>, vector<32x128xbf16>
      tpu.vector_store %arg12[%c0_75, %c0_76], %159 {strides = array<i32>} : memref<32x128xbf16, #tpu.memory_space<vmem>>, vector<32x128xbf16>,
      %161 = arith.index_cast %1 : i32 to index
      %c0_77 = arith.constant 0 : index
      %162 = vector.load %arg2[%161, %c0_77] : memref<32x128xf32, #tpu.memory_space<vmem>>, vector<16x128xf32>
      %c0_78 = arith.constant 0 : index
      %c0_79 = arith.constant 0 : index
      %163 = vector.load %arg13[%c0_78, %c0_79] : memref<16x128xf32, #tpu.memory_space<vmem>>, vector<16x128xf32>
      tpu.vector_store %arg13[%c0_78, %c0_79], %162 {strides = array<i32>} : memref<16x128xf32, #tpu.memory_space<vmem>>, vector<16x128xf32>,
    } else {
    }
    %c0 = arith.constant 0 : index
    %c0_1 = arith.constant 0 : index
    %5 = vector.load %arg12[%c0, %c0_1] : memref<32x128xbf16, #tpu.memory_space<vmem>>, vector<32x128xbf16>
    %6 = arith.index_cast %1 : i32 to index
    %c0_2 = arith.constant 0 : index
    %7 = vector.load %arg12[%6, %c0_2] : memref<32x128xbf16, #tpu.memory_space<vmem>>, vector<16x128xbf16>
    %c0_3 = arith.constant 0 : index
    %c0_4 = arith.constant 0 : index
    %8 = vector.load %arg10[%c0_3, %c0_4] : memref<16x16xf32, #tpu.memory_space<vmem>>, vector<16x16xf32>
    %c0_5 = arith.constant 0 : index
    %c0_6 = arith.constant 0 : index
    %9 = vector.load %arg8[%c0_5, %c0_6] : memref<32x16xf32, #tpu.memory_space<vmem>>, vector<32x16xf32>
    %c0_7 = arith.constant 0 : index
    %c0_8 = arith.constant 0 : index
    %10 = vector.load %arg9[%c0_7, %c0_8] : memref<32x16xf32, #tpu.memory_space<vmem>>, vector<32x16xf32>
    %11 = arith.index_cast %1 : i32 to index
    %c0_9 = arith.constant 0 : index
    %12 = vector.load %arg8[%11, %c0_9] : memref<32x16xf32, #tpu.memory_space<vmem>>, vector<16x16xf32>
    %13 = arith.index_cast %1 : i32 to index
    %c0_10 = arith.constant 0 : index
    %14 = vector.load %arg9[%13, %c0_10] : memref<32x16xf32, #tpu.memory_space<vmem>>, vector<16x16xf32>
    %c0_11 = arith.constant 0 : index
    %c0_12 = arith.constant 0 : index
    %c0_13 = arith.constant 0 : index
    %15 = vector.load %arg5[%c0_11, %c0_12, %c0_13] : memref<1x16x128xbf16, #tpu.memory_space<vmem>>, vector<1x16x128xbf16>
    %16 = vector.shape_cast %15 : vector<1x16x128xbf16> to vector<16x128xbf16>
    %cst = arith.constant dense<0.000000e+00> : vector<32x16xf32>
    %17 = tpu.matmul %5, %16, %cst {dimension_numbers = #tpu.dot_dimension_numbers<[1], [1], [0], [0], [0, 0, 1, 0], [], []>} : vector<32x128xbf16>, vector<16x128xbf16>, vector<32x16xf32> -> vector<32x16xf32>
    %c0_14 = arith.constant 0 : index
    %c0_15 = arith.constant 0 : index
    %c0_16 = arith.constant 0 : index
    %18 = vector.load %arg6[%c0_14, %c0_15, %c0_16] : memref<1x16x128xbf16, #tpu.memory_space<vmem>>, vector<1x16x128xbf16>
    %19 = vector.shape_cast %18 : vector<1x16x128xbf16> to vector<16x128xbf16>
    %cst_17 = arith.constant dense<0.000000e+00> : vector<32x16xf32>
    %20 = tpu.matmul %5, %19, %cst_17 {dimension_numbers = #tpu.dot_dimension_numbers<[1], [1], [0], [0], [0, 0, 1, 0], [], []>} : vector<32x128xbf16>, vector<16x128xbf16>, vector<32x16xf32> -> vector<32x16xf32>
    %21 = arith.mulf %17, %9 : vector<32x16xf32>
    %cst_18 = arith.constant dense<0.000000e+00> : vector<32x16xf32>
    %22 = tpu.matmul %17, %8, %cst_18 {dimension_numbers = #tpu.dot_dimension_numbers<[1], [0], [0], [1], [0, 0, 1, 1], [], []>} : vector<32x16xf32>, vector<16x16xf32>, vector<32x16xf32> -> vector<32x16xf32>
    %23 = arith.mulf %22, %10 : vector<32x16xf32>
    %24 = arith.addf %21, %23 : vector<32x16xf32>
    %25 = arith.truncf %24 : vector<32x16xf32> to vector<32x16xbf16>
    %26 = arith.truncf %20 : vector<32x16xf32> to vector<32x16xbf16>
    %27 = tpu.iota {dimensions = array<i32: 0>} : vector<16x32xi32>
    %28 = vector.broadcast %1 : i32 to vector<16x32xi32>
    %29 = arith.addi %28, %27 : vector<16x32xi32>
    %30 = tpu.iota {dimensions = array<i32: 1>} : vector<16x32xi32>
    %c0_19 = arith.constant 0 : index
    %c0_20 = arith.constant 0 : index
    %c0_21 = arith.constant 0 : index
    %31 = vector.load %arg4[%c0_19, %c0_20, %c0_21] : memref<4x16x128xbf16, #tpu.memory_space<vmem>>, vector<1x16x128xbf16>
    %32 = vector.shape_cast %31 : vector<1x16x128xbf16> to vector<16x128xbf16>
    %cst_22 = arith.constant dense<0.000000e+00> : vector<16x16xf32>
    %33 = tpu.matmul %7, %32, %cst_22 {dimension_numbers = #tpu.dot_dimension_numbers<[1], [1], [0], [0], [0, 0, 1, 0], [], []>} : vector<16x128xbf16>, vector<16x128xbf16>, vector<16x16xf32> -> vector<16x16xf32>
    %34 = arith.mulf %33, %12 : vector<16x16xf32>
    %cst_23 = arith.constant dense<0.000000e+00> : vector<16x16xf32>
    %35 = tpu.matmul %33, %8, %cst_23 {dimension_numbers = #tpu.dot_dimension_numbers<[1], [0], [0], [1], [0, 0, 1, 1], [], []>} : vector<16x16xf32>, vector<16x16xf32>, vector<16x16xf32> -> vector<16x16xf32>
    %36 = arith.mulf %35, %14 : vector<16x16xf32>
    %37 = arith.addf %34, %36 : vector<16x16xf32>
    %38 = arith.truncf %37 : vector<16x16xf32> to vector<16x16xbf16>
    %cst_24 = arith.constant dense<0.000000e+00> : vector<16x32xf32>
    %39 = tpu.matmul %38, %25, %cst_24 {dimension_numbers = #tpu.dot_dimension_numbers<[1], [1], [0], [0], [0, 0, 1, 0], [], []>} : vector<16x16xbf16>, vector<32x16xbf16>, vector<16x32xf32> -> vector<16x32xf32>
    %cst_25 = arith.constant 2.500000e-01 : f32
    %40 = vector.broadcast %cst_25 : f32 to vector<16x32xf32>
    %41 = arith.mulf %39, %40 : vector<16x32xf32>
    %42 = arith.cmpi sgt, %30, %29 : vector<16x32xi32>
    %cst_26 = arith.constant 0xFF800000 : f32
    %43 = vector.broadcast %cst_26 : f32 to vector<16x32xf32>
    %44 = arith.select %42, %43, %41 : vector<16x32xi1>, vector<16x32xf32>
    %cst_27 = arith.constant dense<0xFF800000> : vector<16xf32>
    %45 = vector.multi_reduction <maximumf>, %44, %cst_27 [1] : vector<16x32xf32> to vector<16xf32>
    %46 = vector.shape_cast %45 : vector<16xf32> to vector<16x1xf32>
    %47 = vector.broadcast %46 : vector<16x1xf32> to vector<16x32xf32>
    %48 = arith.subf %44, %47 : vector<16x32xf32>
    %49 = math.exp %48 : vector<16x32xf32>
    %cst_28 = arith.constant dense<0.000000e+00> : vector<16xf32>
    %50 = vector.multi_reduction <add>, %49, %cst_28 [1] : vector<16x32xf32> to vector<16xf32>
    %51 = vector.shape_cast %50 : vector<16xf32> to vector<16x1xf32>
    %52 = tpu.reciprocal %51 {approx = true} : vector<16x1xf32> -> vector<16x1xf32>
    %53 = vector.broadcast %52 : vector<16x1xf32> to vector<16x32xf32>
    %54 = arith.mulf %49, %53 : vector<16x32xf32>
    %55 = arith.truncf %54 : vector<16x32xf32> to vector<16x32xbf16>
    %cst_29 = arith.constant dense<0.000000e+00> : vector<16x16xf32>
    %56 = tpu.matmul %55, %26, %cst_29 {dimension_numbers = #tpu.dot_dimension_numbers<[1], [0], [0], [1], [0, 0, 1, 1], [], []>} : vector<16x32xbf16>, vector<32x16xbf16>, vector<16x16xf32> -> vector<16x16xf32>
    %c1 = arith.constant 1 : index
    %c0_30 = arith.constant 0 : index
    %c0_31 = arith.constant 0 : index
    %57 = vector.load %arg4[%c1, %c0_30, %c0_31] : memref<4x16x128xbf16, #tpu.memory_space<vmem>>, vector<1x16x128xbf16>
    %58 = vector.shape_cast %57 : vector<1x16x128xbf16> to vector<16x128xbf16>
    %cst_32 = arith.constant dense<0.000000e+00> : vector<16x16xf32>
    %59 = tpu.matmul %7, %58, %cst_32 {dimension_numbers = #tpu.dot_dimension_numbers<[1], [1], [0], [0], [0, 0, 1, 0], [], []>} : vector<16x128xbf16>, vector<16x128xbf16>, vector<16x16xf32> -> vector<16x16xf32>
    %60 = arith.mulf %59, %12 : vector<16x16xf32>
    %cst_33 = arith.constant dense<0.000000e+00> : vector<16x16xf32>
    %61 = tpu.matmul %59, %8, %cst_33 {dimension_numbers = #tpu.dot_dimension_numbers<[1], [0], [0], [1], [0, 0, 1, 1], [], []>} : vector<16x16xf32>, vector<16x16xf32>, vector<16x16xf32> -> vector<16x16xf32>
    %62 = arith.mulf %61, %14 : vector<16x16xf32>
    %63 = arith.addf %60, %62 : vector<16x16xf32>
    %64 = arith.truncf %63 : vector<16x16xf32> to vector<16x16xbf16>
    %cst_34 = arith.constant dense<0.000000e+00> : vector<16x32xf32>
    %65 = tpu.matmul %64, %25, %cst_34 {dimension_numbers = #tpu.dot_dimension_numbers<[1], [1], [0], [0], [0, 0, 1, 0], [], []>} : vector<16x16xbf16>, vector<32x16xbf16>, vector<16x32xf32> -> vector<16x32xf32>
    %cst_35 = arith.constant 2.500000e-01 : f32
    %66 = vector.broadcast %cst_35 : f32 to vector<16x32xf32>
    %67 = arith.mulf %65, %66 : vector<16x32xf32>
    %68 = arith.cmpi sgt, %30, %29 : vector<16x32xi32>
    %cst_36 = arith.constant 0xFF800000 : f32
    %69 = vector.broadcast %cst_36 : f32 to vector<16x32xf32>
    %70 = arith.select %68, %69, %67 : vector<16x32xi1>, vector<16x32xf32>
    %cst_37 = arith.constant dense<0xFF800000> : vector<16xf32>
    %71 = vector.multi_reduction <maximumf>, %70, %cst_37 [1] : vector<16x32xf32> to vector<16xf32>
    %72 = vector.shape_cast %71 : vector<16xf32> to vector<16x1xf32>
    %73 = vector.broadcast %72 : vector<16x1xf32> to vector<16x32xf32>
    %74 = arith.subf %70, %73 : vector<16x32xf32>
    %75 = math.exp %74 : vector<16x32xf32>
    %cst_38 = arith.constant dense<0.000000e+00> : vector<16xf32>
    %76 = vector.multi_reduction <add>, %75, %cst_38 [1] : vector<16x32xf32> to vector<16xf32>
    %77 = vector.shape_cast %76 : vector<16xf32> to vector<16x1xf32>
    %78 = tpu.reciprocal %77 {approx = true} : vector<16x1xf32> -> vector<16x1xf32>
    %79 = vector.broadcast %78 : vector<16x1xf32> to vector<16x32xf32>
    %80 = arith.mulf %75, %79 : vector<16x32xf32>
    %81 = arith.truncf %80 : vector<16x32xf32> to vector<16x32xbf16>
    %cst_39 = arith.constant dense<0.000000e+00> : vector<16x16xf32>
    %82 = tpu.matmul %81, %26, %cst_39 {dimension_numbers = #tpu.dot_dimension_numbers<[1], [0], [0], [1], [0, 0, 1, 1], [], []>} : vector<16x32xbf16>, vector<32x16xbf16>, vector<16x16xf32> -> vector<16x16xf32>
    %c2 = arith.constant 2 : index
    %c0_40 = arith.constant 0 : index
    %c0_41 = arith.constant 0 : index
    %83 = vector.load %arg4[%c2, %c0_40, %c0_41] : memref<4x16x128xbf16, #tpu.memory_space<vmem>>, vector<1x16x128xbf16>
    %84 = vector.shape_cast %83 : vector<1x16x128xbf16> to vector<16x128xbf16>
    %cst_42 = arith.constant dense<0.000000e+00> : vector<16x16xf32>
    %85 = tpu.matmul %7, %84, %cst_42 {dimension_numbers = #tpu.dot_dimension_numbers<[1], [1], [0], [0], [0, 0, 1, 0], [], []>} : vector<16x128xbf16>, vector<16x128xbf16>, vector<16x16xf32> -> vector<16x16xf32>
    %86 = arith.mulf %85, %12 : vector<16x16xf32>
    %cst_43 = arith.constant dense<0.000000e+00> : vector<16x16xf32>
    %87 = tpu.matmul %85, %8, %cst_43 {dimension_numbers = #tpu.dot_dimension_numbers<[1], [0], [0], [1], [0, 0, 1, 1], [], []>} : vector<16x16xf32>, vector<16x16xf32>, vector<16x16xf32> -> vector<16x16xf32>
    %88 = arith.mulf %87, %14 : vector<16x16xf32>
    %89 = arith.addf %86, %88 : vector<16x16xf32>
    %90 = arith.truncf %89 : vector<16x16xf32> to vector<16x16xbf16>
    %cst_44 = arith.constant dense<0.000000e+00> : vector<16x32xf32>
    %91 = tpu.matmul %90, %25, %cst_44 {dimension_numbers = #tpu.dot_dimension_numbers<[1], [1], [0], [0], [0, 0, 1, 0], [], []>} : vector<16x16xbf16>, vector<32x16xbf16>, vector<16x32xf32> -> vector<16x32xf32>
    %cst_45 = arith.constant 2.500000e-01 : f32
    %92 = vector.broadcast %cst_45 : f32 to vector<16x32xf32>
    %93 = arith.mulf %91, %92 : vector<16x32xf32>
    %94 = arith.cmpi sgt, %30, %29 : vector<16x32xi32>
    %cst_46 = arith.constant 0xFF800000 : f32
    %95 = vector.broadcast %cst_46 : f32 to vector<16x32xf32>
    %96 = arith.select %94, %95, %93 : vector<16x32xi1>, vector<16x32xf32>
    %cst_47 = arith.constant dense<0xFF800000> : vector<16xf32>
    %97 = vector.multi_reduction <maximumf>, %96, %cst_47 [1] : vector<16x32xf32> to vector<16xf32>
    %98 = vector.shape_cast %97 : vector<16xf32> to vector<16x1xf32>
    %99 = vector.broadcast %98 : vector<16x1xf32> to vector<16x32xf32>
    %100 = arith.subf %96, %99 : vector<16x32xf32>
    %101 = math.exp %100 : vector<16x32xf32>
    %cst_48 = arith.constant dense<0.000000e+00> : vector<16xf32>
    %102 = vector.multi_reduction <add>, %101, %cst_48 [1] : vector<16x32xf32> to vector<16xf32>
    %103 = vector.shape_cast %102 : vector<16xf32> to vector<16x1xf32>
    %104 = tpu.reciprocal %103 {approx = true} : vector<16x1xf32> -> vector<16x1xf32>
    %105 = vector.broadcast %104 : vector<16x1xf32> to vector<16x32xf32>
    %106 = arith.mulf %101, %105 : vector<16x32xf32>
    %107 = arith.truncf %106 : vector<16x32xf32> to vector<16x32xbf16>
    %cst_49 = arith.constant dense<0.000000e+00> : vector<16x16xf32>
    %108 = tpu.matmul %107, %26, %cst_49 {dimension_numbers = #tpu.dot_dimension_numbers<[1], [0], [0], [1], [0, 0, 1, 1], [], []>} : vector<16x32xbf16>, vector<32x16xbf16>, vector<16x16xf32> -> vector<16x16xf32>
    %c3 = arith.constant 3 : index
    %c0_50 = arith.constant 0 : index
    %c0_51 = arith.constant 0 : index
    %109 = vector.load %arg4[%c3, %c0_50, %c0_51] : memref<4x16x128xbf16, #tpu.memory_space<vmem>>, vector<1x16x128xbf16>
    %110 = vector.shape_cast %109 : vector<1x16x128xbf16> to vector<16x128xbf16>
    %cst_52 = arith.constant dense<0.000000e+00> : vector<16x16xf32>
    %111 = tpu.matmul %7, %110, %cst_52 {dimension_numbers = #tpu.dot_dimension_numbers<[1], [1], [0], [0], [0, 0, 1, 0], [], []>} : vector<16x128xbf16>, vector<16x128xbf16>, vector<16x16xf32> -> vector<16x16xf32>
    %112 = arith.mulf %111, %12 : vector<16x16xf32>
    %cst_53 = arith.constant dense<0.000000e+00> : vector<16x16xf32>
    %113 = tpu.matmul %111, %8, %cst_53 {dimension_numbers = #tpu.dot_dimension_numbers<[1], [0], [0], [1], [0, 0, 1, 1], [], []>} : vector<16x16xf32>, vector<16x16xf32>, vector<16x16xf32> -> vector<16x16xf32>
    %114 = arith.mulf %113, %14 : vector<16x16xf32>
    %115 = arith.addf %112, %114 : vector<16x16xf32>
    %116 = arith.truncf %115 : vector<16x16xf32> to vector<16x16xbf16>
    %cst_54 = arith.constant dense<0.000000e+00> : vector<16x32xf32>
    %117 = tpu.matmul %116, %25, %cst_54 {dimension_numbers = #tpu.dot_dimension_numbers<[1], [1], [0], [0], [0, 0, 1, 0], [], []>} : vector<16x16xbf16>, vector<32x16xbf16>, vector<16x32xf32> -> vector<16x32xf32>
    %cst_55 = arith.constant 2.500000e-01 : f32
    %118 = vector.broadcast %cst_55 : f32 to vector<16x32xf32>
    %119 = arith.mulf %117, %118 : vector<16x32xf32>
    %120 = arith.cmpi sgt, %30, %29 : vector<16x32xi32>
    %cst_56 = arith.constant 0xFF800000 : f32
    %121 = vector.broadcast %cst_56 : f32 to vector<16x32xf32>
    %122 = arith.select %120, %121, %119 : vector<16x32xi1>, vector<16x32xf32>
    %cst_57 = arith.constant dense<0xFF800000> : vector<16xf32>
    %123 = vector.multi_reduction <maximumf>, %122, %cst_57 [1] : vector<16x32xf32> to vector<16xf32>
    %124 = vector.shape_cast %123 : vector<16xf32> to vector<16x1xf32>
    %125 = vector.broadcast %124 : vector<16x1xf32> to vector<16x32xf32>
    %126 = arith.subf %122, %125 : vector<16x32xf32>
    %127 = math.exp %126 : vector<16x32xf32>
    %cst_58 = arith.constant dense<0.000000e+00> : vector<16xf32>
    %128 = vector.multi_reduction <add>, %127, %cst_58 [1] : vector<16x32xf32> to vector<16xf32>
    %129 = vector.shape_cast %128 : vector<16xf32> to vector<16x1xf32>
    %130 = tpu.reciprocal %129 {approx = true} : vector<16x1xf32> -> vector<16x1xf32>
    %131 = vector.broadcast %130 : vector<16x1xf32> to vector<16x32xf32>
    %132 = arith.mulf %127, %131 : vector<16x32xf32>
    %133 = arith.truncf %132 : vector<16x32xf32> to vector<16x32xbf16>
    %cst_59 = arith.constant dense<0.000000e+00> : vector<16x16xf32>
    %134 = tpu.matmul %133, %26, %cst_59 {dimension_numbers = #tpu.dot_dimension_numbers<[1], [0], [0], [1], [0, 0, 1, 1], [], []>} : vector<16x32xbf16>, vector<32x16xbf16>, vector<16x16xf32> -> vector<16x16xf32>
    %135 = tpu.concatenate %56, %82, %108, %134 in 1 : vector<16x16xf32>, vector<16x16xf32>, vector<16x16xf32>, vector<16x16xf32> -> vector<16x64xf32>
    %136 = arith.truncf %135 : vector<16x64xf32> to vector<16x64xbf16>
    %c0_60 = arith.constant 0 : index
    %c0_61 = arith.constant 0 : index
    %137 = vector.load %arg13[%c0_60, %c0_61] : memref<16x128xf32, #tpu.memory_space<vmem>>, vector<16x128xf32>
    %c0_62 = arith.constant 0 : index
    %c0_63 = arith.constant 0 : index
    %138 = vector.load %arg7[%c0_62, %c0_63] : memref<64x128xbf16, #tpu.memory_space<vmem>>, vector<64x128xbf16>
    %cst_64 = arith.constant dense<0.000000e+00> : vector<16x128xf32>
    %139 = tpu.matmul %136, %138, %cst_64 {dimension_numbers = #tpu.dot_dimension_numbers<[1], [0], [0], [1], [0, 0, 1, 1], [], []>} : vector<16x64xbf16>, vector<64x128xbf16>, vector<16x128xf32> -> vector<16x128xf32>
    %140 = arith.addf %137, %139 : vector<16x128xf32>
    %c0_65 = arith.constant 0 : index
    %c0_66 = arith.constant 0 : index
    %141 = vector.load %arg13[%c0_65, %c0_66] : memref<16x128xf32, #tpu.memory_space<vmem>>, vector<16x128xf32>
    tpu.vector_store %arg13[%c0_65, %c0_66], %140 {strides = array<i32>} : memref<16x128xf32, #tpu.memory_space<vmem>>, vector<16x128xf32>,
    %c1_i32 = arith.constant 1 : i32
    %142 = arith.cmpi eq, %arg1, %c1_i32 : i32
    %143 = arith.extui %142 : i1 to i32
    %c0_i32_67 = arith.constant 0 : i32
    %144 = arith.cmpi ne, %143, %c0_i32_67 : i32
    scf.if %144 {
      %c0_68 = arith.constant 0 : index
      %c0_69 = arith.constant 0 : index
      %145 = vector.load %arg13[%c0_68, %c0_69] : memref<16x128xf32, #tpu.memory_space<vmem>>, vector<16x128xf32>
      %c0_70 = arith.constant 0 : index
      %c0_71 = arith.constant 0 : index
      %146 = vector.load %arg11[%c0_70, %c0_71] : memref<16x128xf32, #tpu.memory_space<vmem>>, vector<16x128xf32>
      tpu.vector_store %arg11[%c0_70, %c0_71], %145 {strides = array<i32>} : memref<16x128xf32, #tpu.memory_space<vmem>>, vector<16x128xf32>,
    } else {
    }
    return
  }
  func.func @transform_0(%arg0: i32, %arg1: i32) -> (i32, i32) {
    %c0_i32 = arith.constant 0 : i32
    %c0_i32_0 = arith.constant 0 : i32
    %c0_i32_1 = arith.constant 0 : i32
    return %c0_i32, %c0_i32_0 : i32, i32
  }
  func.func @transform_1(%arg0: i32, %arg1: i32) -> (i32, i32) {
    %c0_i32 = arith.constant 0 : i32
    %c0_i32_0 = arith.constant 0 : i32
    %c0_i32_1 = arith.constant 0 : i32
    return %c0_i32, %c0_i32_0 : i32, i32
  }
  func.func @transform_2(%arg0: i32, %arg1: i32) -> (i32, i32, i32) {
    %c0_i32 = arith.constant 0 : i32
    %c0_i32_0 = arith.constant 0 : i32
    %c0_i32_1 = arith.constant 0 : i32
    return %arg1, %c0_i32, %c0_i32_0 : i32, i32, i32
  }
  func.func @transform_3(%arg0: i32, %arg1: i32) -> (i32, i32, i32) {
    %c0_i32 = arith.constant 0 : i32
    %c0_i32_0 = arith.constant 0 : i32
    %c0_i32_1 = arith.constant 0 : i32
    return %arg1, %c0_i32, %c0_i32_0 : i32, i32, i32
  }
  func.func @transform_4(%arg0: i32, %arg1: i32) -> (i32, i32, i32) {
    %c0_i32 = arith.constant 0 : i32
    %c0_i32_0 = arith.constant 0 : i32
    %c0_i32_1 = arith.constant 0 : i32
    return %arg1, %c0_i32, %c0_i32_0 : i32, i32, i32
  }
  func.func @transform_5(%arg0: i32, %arg1: i32) -> (i32, i32) {
    %c0_i32 = arith.constant 0 : i32
    %c0_i32_0 = arith.constant 0 : i32
    return %arg1, %c0_i32 : i32, i32
  }
  func.func @transform_6(%arg0: i32, %arg1: i32) -> (i32, i32) {
    %c0_i32 = arith.constant 0 : i32
    %c0_i32_0 = arith.constant 0 : i32
    %c0_i32_1 = arith.constant 0 : i32
    return %c0_i32, %c0_i32_0 : i32, i32
  }
  func.func @transform_7(%arg0: i32, %arg1: i32) -> (i32, i32) {
    %c0_i32 = arith.constant 0 : i32
    %c0_i32_0 = arith.constant 0 : i32
    %c0_i32_1 = arith.constant 0 : i32
    return %c0_i32, %c0_i32_0 : i32, i32
  }
  func.func @transform_8(%arg0: i32, %arg1: i32) -> (i32, i32) {
    %c0_i32 = arith.constant 0 : i32
    %c0_i32_0 = arith.constant 0 : i32
    %c0_i32_1 = arith.constant 0 : i32
    return %c0_i32, %c0_i32_0 : i32, i32
  }
  func.func @transform_9(%arg0: i32, %arg1: i32) -> (i32, i32) {
    %c0_i32 = arith.constant 0 : i32
    %c0_i32_0 = arith.constant 0 : i32
    return %arg0, %c0_i32 : i32, i32
  }
}

</mosaic_0001>

<llo_original>
// kernel: tpu_custom_call.1
$region0: #{tpu_custom_call.1}
  #allocation0 [shape = 'u32[]', space=smem, size = 0x4, offset = 0x4, fixed_abs, tag = 'smem constant byte address 0x4 - core index']
  #allocation1 [shape = 'u32[144,128]{1,0:T(1,128)}', space=vmem, size = 0x12000, scoped, tag = 'internal scratch']
  #allocation2 [shape = 'bf16[32,128]{1,0:T(16,128)(2,1)}', space=vmem, size = 0x2000, scoped, tag = 'scratch operand']
  #allocation3 [shape = 'f32[16,128]{1,0:T(8,128)}', space=vmem, size = 0x2000, scoped, tag = 'scratch operand']
  %s0 = inlined_call_operand.vmem [shape: f32[32,128], index: 0, kind: input, shape index: {}]
  %s1 = inlined_call_operand.vmem [shape: f32[1,128], index: 1, kind: input, shape index: {}]
  %s2 = inlined_call_operand.vmem [shape: bf16[8,16,128], index: 2, kind: input, shape index: {}]
  %s3 = inlined_call_operand.hbm [shape: bf16[2,16,128], index: 3, kind: input, shape index: {}]
  %s4 = inlined_call_operand.hbm [shape: bf16[2,16,128], index: 4, kind: input, shape index: {}]
  %s5 = inlined_call_operand.hbm [shape: bf16[128,128], index: 5, kind: input, shape index: {}]
  %s6 = inlined_call_operand.vmem [shape: f32[32,16], index: 6, kind: input, shape index: {}]
  %s7 = inlined_call_operand.vmem [shape: f32[32,16], index: 7, kind: input, shape index: {}]
  %s8 = inlined_call_operand.hbm [shape: f32[16,16], index: 8, kind: input, shape index: {}]
  %s9 = inlined_call_operand.hbm [shape: f32[32,128], index: 9, kind: output, shape index: {}]
  %s10 = sld [smem:[#allocation0]]
  $region93: #{tpu_custom_call.1} parent=0
    _
  %s12 = ssub.s32 1, %s10
  %s13 = scalar_select 0, %s12, %s10
  $region1: #{tpu_custom_call.1} parent=0
    #allocation4 [shape = 'u8[8192]{0}', space=vmem, size = 0x2000, scoped, tag = 'input window, operand 3']
    #allocation5 [shape = 's32[2]{0}', space=sflag, size = 0x8, scoped, tag = 'scoped memory for tpu_custom_call.1']
    #allocation6 [shape = 's32[2]{0}', space=sflag, size = 0x8, scoped, tag = 'scoped memory for tpu_custom_call.1']
    #allocation7 [shape = 'u8[8192]{0}', space=vmem, size = 0x2000, scoped, tag = 'input window, operand 4']
    #allocation8 [shape = 's32[2]{0}', space=sflag, size = 0x8, scoped, tag = 'scoped memory for tpu_custom_call.1']
    #allocation9 [shape = 'u8[32768]{0}', space=vmem, size = 0x8000, scoped, tag = 'input window, operand 5']
    #allocation10 [shape = 'u8[8192]{0}', space=vmem, size = 0x2000, scoped, tag = 'input window, operand 8, single buffered']
    #allocation11 [shape = 's32[1]{0}', space=sflag, size = 0x4, scoped, tag = 'scoped memory for tpu_custom_call.1']
    #allocation12 [shape = 'u8[16384]{0}', space=vmem, size = 0x4000, scoped, tag = 'output window, operand 0']
    %14 = vsyncpa [#allocation5], 0
    %s15 = scalar_lea.sflag [#allocation5], 1
    %16 = vsyncpa %s15, 0
    %17 = vsyncpa [#allocation8], 0
    %s18 = scalar_lea.sflag [#allocation8], 1
    %19 = vsyncpa %s18, 0
    %20 = vsyncpa [#allocation11], 0
    %21 = vsyncpa [#allocation6], 0
    %s22 = scalar_lea.sflag [#allocation6], 1
    %23 = vsyncpa %s22, 0
    loop: start=0, step=1, limit=6
    $region2: #{tpu_custom_call.1} parent=1 // loop_pre_header
      _
    $region3: #{tpu_custom_call.1} parent=1 // loop_header
      %s25 = sphi 0, %s29
      %p26 = scmp.ge.s32.totalorder %s25, 6
      %s32 = sphi 0, %s44
      %s33 = sphi 0, %s40
      %s34 = sphi 0, %s32
      %s35 = sphi 0, %s33
      %s36 = sphi 0, %s34
      %s37 = sphi 0, %s35
      %s45 = sphi 0, %s45
      %s47 = sphi 0, %s45
      %s48 = sphi 0, %s47
      %s62 = sphi 0, %s48
      %s66 = sphi 0, %s66
      %s68 = sphi 0, %s66
      %s69 = sphi 0, %s68
      %s83 = sphi 0, %s69
      %s89 = sphi 0, %s91
      %s92 = sphi 0, %s89
      %s93 = sphi 0, %s92
      %s109 = sphi 0, %s93
      %s115 = sphi 0, %s117
      %s118 = sphi 0, %s115
      %s119 = sphi 0, %s118
      %s135 = sphi 0, %s119
      %s141 = sphi 0, %s143
      %s144 = sphi 0, %s141
      %s145 = sphi 0, %s144
      %s161 = sphi 0, %s145
      %s167 = sphi 0, %s169
      %s170 = sphi 0, %s167
      %s171 = sphi 0, %s170
      %s187 = sphi 0, %s171
      %s191 = sphi 0, %s191
      %s193 = sphi 0, %s191
      %s194 = sphi 0, %s193
      %s208 = sphi 0, %s194
      %s212 = sphi 0, %s212
      %s214 = sphi 0, %s212
      %s215 = sphi 0, %s214
      %s229 = sphi 0, %s215
      %s233 = sphi 0, %s233
      %s235 = sphi 0, %s233
      %s236 = sphi 0, %s235
      %s250 = sphi 0, %s236
      %s256 = sphi 0, %s258
      %s259 = sphi 0, %s256
      %s260 = sphi 0, %s259
      %s276 = sphi 0, %s260
    $region4: #{tpu_custom_call.1} parent=1 // loop_header_branch
      %28 = sbr.rel (%p26) target = $region8
    $region5: #{tpu_custom_call.1} parent=1 // loop_body
      %s30 = ssub.s32 %s25, 1
      %s31 = ssub.s32 %s25, 2
      %s38 = sadd.s32 1, %s33
      %p39 = scmp.ge.s32.totalorder %s38, 2
      %s40 = scalar_select %p39, 0, %s38
      %s41 = sadd.s32 1, %s32
      %s42 = scalar_select %p39, %s41, %s32
      %p43 = scmp.ge.s32.totalorder %s42, 2
      %s44 = scalar_select %p43, 0, %s42
      %s46 = sadd.s32 %s45, 1
      %p49 = scmp.eq.s32.totalorder %s25, 3
      %p50 = scmp.ne.s32.totalorder %s45, %s47
      %p51 = scmp.eq.s32.totalorder %s25, 0
      %p52 = por %p50, %p51
      %p53 = scmp.ne.s32.totalorder %s45, %s47
      %p54 = scmp.eq.s32.totalorder %s30, 3
      %p55 = por %p53, %p54
      %p56 = scmp.ne.s32.totalorder %s47, %s48
      %p57 = scmp.eq.s32.totalorder %s30, 0
      %p58 = por %p56, %p57
      %p59 = scmp.ne.s32.totalorder %s47, %s48
      %p60 = scmp.eq.s32.totalorder %s31, 3
      %p61 = por %p59, %p60
      %p63 = scmp.ne.s32.totalorder %s48, %s62
      %p64 = scmp.eq.s32.totalorder %s31, 0
      %p65 = por %p63, %p64
      %s67 = sadd.s32 %s66, 1
      %p70 = scmp.eq.s32.totalorder %s25, 3
      %p71 = scmp.ne.s32.totalorder %s66, %s68
      %p72 = scmp.eq.s32.totalorder %s25, 0
      %p73 = por %p71, %p72
      %p74 = scmp.ne.s32.totalorder %s66, %s68
      %p75 = scmp.eq.s32.totalorder %s30, 3
      %p76 = por %p74, %p75
      %p77 = scmp.ne.s32.totalorder %s68, %s69
      %p78 = scmp.eq.s32.totalorder %s30, 0
      %p79 = por %p77, %p78
      %p80 = scmp.ne.s32.totalorder %s68, %s69
      %p81 = scmp.eq.s32.totalorder %s31, 3
      %p82 = por %p80, %p81
      %p84 = scmp.ne.s32.totalorder %s69, %s83
      %p85 = scmp.eq.s32.totalorder %s31, 0
      %p86 = por %p84, %p85
      %s87 = ssub.s32 %s33, %s40
      %p88 = scmp.eq.s32.totalorder %s87, 0
      %s90 = sadd.s32 %s89, 1
      %s91 = scalar_select %p88, %s89, %s90
      %p94 = pneg %p88
      %p95 = scmp.eq.s32.totalorder %s25, 3
      %p96 = por %p94, %p95
      %p97 = scmp.ne.s32.totalorder %s89, %s92
      %p98 = scmp.eq.s32.totalorder %s25, 0
      %p99 = por %p97, %p98
      %p100 = scmp.ne.s32.totalorder %s89, %s92
      %p101 = scmp.eq.s32.totalorder %s30, 3
      %p102 = por %p100, %p101
      %p103 = scmp.ne.s32.totalorder %s92, %s93
      %p104 = scmp.eq.s32.totalorder %s30, 0
      %p105 = por %p103, %p104
      %p106 = scmp.ne.s32.totalorder %s92, %s93
      %p107 = scmp.eq.s32.totalorder %s31, 3
      %p108 = por %p106, %p107
      %p110 = scmp.ne.s32.totalorder %s93, %s109
      %p111 = scmp.eq.s32.totalorder %s31, 0
      %p112 = por %p110, %p111
      %s113 = ssub.s32 %s33, %s40
      %p114 = scmp.eq.s32.totalorder %s113, 0
      %s116 = sadd.s32 %s115, 1
      %s117 = scalar_select %p114, %s115, %s116
      %p120 = pneg %p114
      %p121 = scmp.eq.s32.totalorder %s25, 3
      %p122 = por %p120, %p121
      %p123 = scmp.ne.s32.totalorder %s115, %s118
      %p124 = scmp.eq.s32.totalorder %s25, 0
      %p125 = por %p123, %p124
      %p126 = scmp.ne.s32.totalorder %s115, %s118
      %p127 = scmp.eq.s32.totalorder %s30, 3
      %p128 = por %p126, %p127
      %p129 = scmp.ne.s32.totalorder %s118, %s119
      %p130 = scmp.eq.s32.totalorder %s30, 0
      %p131 = por %p129, %p130
      %p132 = scmp.ne.s32.totalorder %s118, %s119
      %p133 = scmp.eq.s32.totalorder %s31, 3
      %p134 = por %p132, %p133
      %p136 = scmp.ne.s32.totalorder %s119, %s135
      %p137 = scmp.eq.s32.totalorder %s31, 0
      %p138 = por %p136, %p137
      %s139 = ssub.s32 %s33, %s40
      %p140 = scmp.eq.s32.totalorder %s139, 0
      %s142 = sadd.s32 %s141, 1
      %s143 = scalar_select %p140, %s141, %s142
      %p146 = pneg %p140
      %p147 = scmp.eq.s32.totalorder %s25, 3
      %p148 = por %p146, %p147
      %p149 = scmp.ne.s32.totalorder %s141, %s144
      %p150 = scmp.eq.s32.totalorder %s25, 0
      %p151 = por %p149, %p150
      %p152 = scmp.ne.s32.totalorder %s141, %s144
      %p153 = scmp.eq.s32.totalorder %s30, 3
      %p154 = por %p152, %p153
      %p155 = scmp.ne.s32.totalorder %s144, %s145
      %p156 = scmp.eq.s32.totalorder %s30, 0
      %p157 = por %p155, %p156
      %p158 = scmp.ne.s32.totalorder %s144, %s145
      %p159 = scmp.eq.s32.totalorder %s31, 3
      %p160 = por %p158, %p159
      %p162 = scmp.ne.s32.totalorder %s145, %s161
      %p163 = scmp.eq.s32.totalorder %s31, 0
      %p164 = por %p162, %p163
      %s165 = ssub.s32 %s33, %s40
      %p166 = scmp.eq.s32.totalorder %s165, 0
      %s168 = sadd.s32 %s167, 1
      %s169 = scalar_select %p166, %s167, %s168
      %p172 = pneg %p166
      %p173 = scmp.eq.s32.totalorder %s25, 3
      %p174 = por %p172, %p173
      %p175 = scmp.ne.s32.totalorder %s167, %s170
      %p176 = scmp.eq.s32.totalorder %s25, 0
      %p177 = por %p175, %p176
      %p178 = scmp.ne.s32.totalorder %s167, %s170
      %p179 = scmp.eq.s32.totalorder %s30, 3
      %p180 = por %p178, %p179
      %p181 = scmp.ne.s32.totalorder %s170, %s171
      %p182 = scmp.eq.s32.totalorder %s30, 0
      %p183 = por %p181, %p182
      %p184 = scmp.ne.s32.totalorder %s170, %s171
      %p185 = scmp.eq.s32.totalorder %s31, 3
      %p186 = por %p184, %p185
      %p188 = scmp.ne.s32.totalorder %s171, %s187
      %p189 = scmp.eq.s32.totalorder %s31, 0
      %p190 = por %p188, %p189
      %s192 = sadd.s32 %s191, 1
      %p195 = scmp.eq.s32.totalorder %s25, 3
      %p196 = scmp.ne.s32.totalorder %s191, %s193
      %p197 = scmp.eq.s32.totalorder %s25, 0
      %p198 = por %p196, %p197
      %p199 = scmp.ne.s32.totalorder %s191, %s193
      %p200 = scmp.eq.s32.totalorder %s30, 3
      %p201 = por %p199, %p200
      %p202 = scmp.ne.s32.totalorder %s193, %s194
      %p203 = scmp.eq.s32.totalorder %s30, 0
      %p204 = por %p202, %p203
      %p205 = scmp.ne.s32.totalorder %s193, %s194
      %p206 = scmp.eq.s32.totalorder %s31, 3
      %p207 = por %p205, %p206
      %p209 = scmp.ne.s32.totalorder %s194, %s208
      %p210 = scmp.eq.s32.totalorder %s31, 0
      %p211 = por %p209, %p210
      %s213 = sadd.s32 %s212, 1
      %p216 = scmp.eq.s32.totalorder %s25, 3
      %p217 = scmp.ne.s32.totalorder %s212, %s214
      %p218 = scmp.eq.s32.totalorder %s25, 0
      %p219 = por %p217, %p218
      %p220 = scmp.ne.s32.totalorder %s212, %s214
      %p221 = scmp.eq.s32.totalorder %s30, 3
      %p222 = por %p220, %p221
      %p223 = scmp.ne.s32.totalorder %s214, %s215
      %p224 = scmp.eq.s32.totalorder %s30, 0
      %p225 = por %p223, %p224
      %p226 = scmp.ne.s32.totalorder %s214, %s215
      %p227 = scmp.eq.s32.totalorder %s31, 3
      %p228 = por %p226, %p227
      %p230 = scmp.ne.s32.totalorder %s215, %s229
      %p231 = scmp.eq.s32.totalorder %s31, 0
      %p232 = por %p230, %p231
      %s234 = sadd.s32 %s233, 1
      %p237 = scmp.eq.s32.totalorder %s25, 3
      %p238 = scmp.ne.s32.totalorder %s233, %s235
      %p239 = scmp.eq.s32.totalorder %s25, 0
      %p240 = por %p238, %p239
      %p241 = scmp.ne.s32.totalorder %s233, %s235
      %p242 = scmp.eq.s32.totalorder %s30, 3
      %p243 = por %p241, %p242
      %p244 = scmp.ne.s32.totalorder %s235, %s236
      %p245 = scmp.eq.s32.totalorder %s30, 0
      %p246 = por %p244, %p245
      %p247 = scmp.ne.s32.totalorder %s235, %s236
      %p248 = scmp.eq.s32.totalorder %s31, 3
      %p249 = por %p247, %p248
      %p251 = scmp.ne.s32.totalorder %s236, %s250
      %p252 = scmp.eq.s32.totalorder %s31, 0
      %p253 = por %p251, %p252
      %s254 = ssub.s32 %s32, %s44
      %p255 = scmp.eq.s32.totalorder %s254, 0
      %s257 = sadd.s32 %s256, 1
      %s258 = scalar_select %p255, %s256, %s257
      %p261 = pneg %p255
      %p262 = scmp.eq.s32.totalorder %s25, 3
      %p263 = por %p261, %p262
      %p264 = scmp.ne.s32.totalorder %s256, %s259
      %p265 = scmp.eq.s32.totalorder %s25, 0
      %p266 = por %p264, %p265
      %p267 = scmp.ne.s32.totalorder %s256, %s259
      %p268 = scmp.eq.s32.totalorder %s30, 3
      %p269 = por %p267, %p268
      %p270 = scmp.ne.s32.totalorder %s259, %s260
      %p271 = scmp.eq.s32.totalorder %s30, 0
      %p272 = por %p270, %p271
      %p273 = scmp.ne.s32.totalorder %s259, %s260
      %p274 = scmp.eq.s32.totalorder %s31, 3
      %p275 = por %p273, %p274
      %p277 = scmp.ne.s32.totalorder %s260, %s276
      %p278 = scmp.eq.s32.totalorder %s31, 0
      %p279 = por %p277, %p278
      %p280 = scmp.le.s32.totalorder 1, %s25
      %p281 = scmp.lt.s32.totalorder %s25, 5
      %p282 = pnand %p280, %p281
      %p283 = pneg %p282
      // Predicated region
      $region9: #{tpu_custom_call.1} parent=5 // pred_check
        _
      $region10: #{tpu_custom_call.1} parent=5 // pred_check_branch
        %285 = sbr.rel (%p282) target = $region12
      $region11: #{tpu_custom_call.1} parent=5 // pred_region
        %s286 = ssub.s32 %s25, 1
        // Predicated region
        $region13: #{tpu_custom_call.1} parent=11 // pred_check
          %p287 = pneg %p58
        $region14: #{tpu_custom_call.1} parent=11 // pred_check_branch
          %289 = sbr.rel (%p287) target = $region16
        $region15: #{tpu_custom_call.1} parent=11 // pred_region
          _
        $region16: #{tpu_custom_call.1} parent=11 // pred_fallthru
          _
        // Predicated region
        $region17: #{tpu_custom_call.1} parent=11 // pred_check
          %p290 = pneg %p79
        $region18: #{tpu_custom_call.1} parent=11 // pred_check_branch
          %292 = sbr.rel (%p290) target = $region20
        $region19: #{tpu_custom_call.1} parent=11 // pred_region
          _
        $region20: #{tpu_custom_call.1} parent=11 // pred_fallthru
          _
        // Predicated region
        $region21: #{tpu_custom_call.1} parent=11 // pred_check
          %p293 = pneg %p204
        $region22: #{tpu_custom_call.1} parent=11 // pred_check_branch
          %295 = sbr.rel (%p293) target = $region24
        $region23: #{tpu_custom_call.1} parent=11 // pred_region
          _
        $region24: #{tpu_custom_call.1} parent=11 // pred_fallthru
          _
        // Predicated region
        $region25: #{tpu_custom_call.1} parent=11 // pred_check
          %p296 = pneg %p225
        $region26: #{tpu_custom_call.1} parent=11 // pred_check_branch
          %298 = sbr.rel (%p296) target = $region28
        $region27: #{tpu_custom_call.1} parent=11 // pred_region
          _
        $region28: #{tpu_custom_call.1} parent=11 // pred_fallthru
          _
        // Predicated region
        $region29: #{tpu_custom_call.1} parent=11 // pred_check
          %p299 = pneg %p246
        $region30: #{tpu_custom_call.1} parent=11 // pred_check_branch
          %301 = sbr.rel (%p299) target = $region32
        $region31: #{tpu_custom_call.1} parent=11 // pred_region
          %s303 = ssub.s32 256, 256
          %304 = vsyncadd [#allocation11], %s303
          %s305 = sshll.u32 [#allocation10], 4
          %s306 = int_to_ptr.vmem [resolvable:$true] %s305
          %311 = dma.hbm_to_vmem [thread:$0]  %s8, 256, %s306, [#allocation11], 128, 128, 8
        $region32: #{tpu_custom_call.1} parent=11 // pred_fallthru
          _
      $region12: #{tpu_custom_call.1} parent=5 // pred_fallthru
        _
      %p312 = scmp.lt.s32.totalorder %s25, 4
      // Predicated region
      $region33: #{tpu_custom_call.1} parent=5 // pred_check
        %p313 = pneg %p312
      $region34: #{tpu_custom_call.1} parent=5 // pred_check_branch
        %315 = sbr.rel (%p313) target = $region36
      $region35: #{tpu_custom_call.1} parent=5 // pred_region
        // Predicated region
        $region37: #{tpu_custom_call.1} parent=35 // pred_check
          %p316 = pneg %p99
        $region38: #{tpu_custom_call.1} parent=35 // pred_check_branch
          %318 = sbr.rel (%p316) target = $region40
        $region39: #{tpu_custom_call.1} parent=35 // pred_region
          %s319 = smul.u32 4, %s33
          %p320 = scmp.lt.s32.totalorder %s319, 7
          %s321 = scalar_select %p320, %s319, 7
          %s322 = smul.addr %s321, 2
          %s323 = smul.addr %s322, 4
          %s324 = scalar_lea.vmem %s2, %s323
          %s325 = smul.u32 4, %s33
        $region40: #{tpu_custom_call.1} parent=35 // pred_fallthru
          _
        // Predicated region
        $region41: #{tpu_custom_call.1} parent=35 // pred_check
          %p326 = pneg %p125
        $region42: #{tpu_custom_call.1} parent=35 // pred_check_branch
          %328 = sbr.rel (%p326) target = $region44
        $region43: #{tpu_custom_call.1} parent=35 // pred_region
          %s329 = sand.u32 %s115, 1
          %s330 = scalar_lea.sflag [#allocation5], %s329
          %s331 = sand.u32 %s115, 1
          %s332 = smul.addr %s331, 8
          %s333 = scalar_lea.vmem [#allocation4], %s332
          %s335 = ssub.s32 128, 128
          %336 = vsyncadd %s330, %s335
          %s337 = smul.addr %s33, 2
          %s338 = smul.addr %s337, 64
          %s339 = scalar_lea.hbm %s3, %s338
          %s340 = sshll.u32 %s333, 4
          %s341 = int_to_ptr.vmem [resolvable:$true] %s340
          %346 = dma.hbm_to_vmem [thread:$0]  %s339, 128, %s341, %s330, 64, 64, 4
        $region44: #{tpu_custom_call.1} parent=35 // pred_fallthru
          _
        // Predicated region
        $region45: #{tpu_custom_call.1} parent=35 // pred_check
          %p347 = pneg %p151
        $region46: #{tpu_custom_call.1} parent=35 // pred_check_branch
          %349 = sbr.rel (%p347) target = $region48
        $region47: #{tpu_custom_call.1} parent=35 // pred_region
          %s350 = sand.u32 %s25, 1
          %s351 = scalar_lea.sflag [#allocation8], %s350
          %s352 = sand.u32 %s141, 1
          %s353 = smul.addr %s352, 8
          %s354 = scalar_lea.vmem [#allocation7], %s353
          %s356 = ssub.s32 128, 128
          %357 = vsyncadd %s351, %s356
          %s358 = smul.addr %s33, 2
          %s359 = smul.addr %s358, 64
          %s360 = scalar_lea.hbm %s4, %s359
          %s361 = sshll.u32 %s354, 4
          %s362 = int_to_ptr.vmem [resolvable:$true] %s361
          %367 = dma.hbm_to_vmem [thread:$0]  %s360, 128, %s362, %s351, 64, 64, 4
        $region48: #{tpu_custom_call.1} parent=35 // pred_fallthru
          _
        // Predicated region
        $region49: #{tpu_custom_call.1} parent=35 // pred_check
          %p368 = pneg %p177
        $region50: #{tpu_custom_call.1} parent=35 // pred_check_branch
          %370 = sbr.rel (%p368) target = $region52
        $region51: #{tpu_custom_call.1} parent=35 // pred_region
          %s371 = sand.u32 %s25, 1
          %s372 = scalar_lea.sflag [#allocation8], %s371
          %s373 = sand.u32 %s167, 1
          %s374 = smul.addr %s373, 32
          %s375 = scalar_lea.vmem [#allocation9], %s374
          %s376 = smul.u32 8, %s33
          %s378 = ssub.s32 512, 512
          %379 = vsyncadd %s372, %s378
          %s380 = smul.addr %s376, 64
          %s381 = scalar_lea.hbm %s5, %s380
          %s382 = sshll.u32 %s375, 4
          %s383 = int_to_ptr.vmem [resolvable:$true] %s382
          %388 = dma.hbm_to_vmem [thread:$0]  %s381, 512, %s383, %s372, 64, 64, 4
        $region52: #{tpu_custom_call.1} parent=35 // pred_fallthru
          _
      $region36: #{tpu_custom_call.1} parent=5 // pred_fallthru
        _
      %p389 = scmp.le.s32.totalorder 1, %s25
      %p390 = scmp.lt.s32.totalorder %s25, 5
      %p391 = pnand %p389, %p390
      %p392 = pneg %p391
      // Predicated region
      $region53: #{tpu_custom_call.1} parent=5 // pred_check
        _
      $region54: #{tpu_custom_call.1} parent=5 // pred_check_branch
        %394 = sbr.rel (%p391) target = $region56
      $region55: #{tpu_custom_call.1} parent=5 // pred_region
        %s395 = ssub.s32 %s25, 1
        %s396 = sand.u32 %s118, 1
        %s397 = scalar_lea.sflag [#allocation5], %s396
        %s398 = sand.u32 %s118, 1
        %s399 = smul.addr %s398, 8
        %s400 = scalar_lea.vmem [#allocation4], %s399
        // Predicated region
        $region57: #{tpu_custom_call.1} parent=55 // pred_check
          %p401 = pneg %p131
        $region58: #{tpu_custom_call.1} parent=55 // pred_check_branch
          %403 = sbr.rel (%p401) target = $region60
        $region59: #{tpu_custom_call.1} parent=55 // pred_region
          %404 = dma.done %s397, 128
        $region60: #{tpu_custom_call.1} parent=55 // pred_fallthru
          _
        %s405 = sand.u32 %s30, 1
        %s406 = scalar_lea.sflag [#allocation8], %s405
        %s407 = sand.u32 %s144, 1
        %s408 = smul.addr %s407, 8
        %s409 = scalar_lea.vmem [#allocation7], %s408
        // Predicated region
        $region61: #{tpu_custom_call.1} parent=55 // pred_check
          %p410 = pneg %p157
        $region62: #{tpu_custom_call.1} parent=55 // pred_check_branch
          %412 = sbr.rel (%p410) target = $region64
        $region63: #{tpu_custom_call.1} parent=55 // pred_region
          %413 = dma.done %s406, 128
        $region64: #{tpu_custom_call.1} parent=55 // pred_fallthru
          _
        %s414 = sand.u32 %s30, 1
        %s415 = scalar_lea.sflag [#allocation8], %s414
        %s416 = sand.u32 %s170, 1
        %s417 = smul.addr %s416, 32
        %s418 = scalar_lea.vmem [#allocation9], %s417
        // Predicated region
        $region65: #{tpu_custom_call.1} parent=55 // pred_check
          %p419 = pneg %p183
        $region66: #{tpu_custom_call.1} parent=55 // pred_check_branch
          %421 = sbr.rel (%p419) target = $region68
        $region67: #{tpu_custom_call.1} parent=55 // pred_region
          %422 = dma.done %s415, 512
        $region68: #{tpu_custom_call.1} parent=55 // pred_fallthru
          _
        // Predicated region
        $region69: #{tpu_custom_call.1} parent=55 // pred_check
          %p423 = pneg %p246
        $region70: #{tpu_custom_call.1} parent=55 // pred_check_branch
          %425 = sbr.rel (%p423) target = $region72
        $region71: #{tpu_custom_call.1} parent=55 // pred_region
          %426 = dma.done [#allocation11], 256
        $region72: #{tpu_custom_call.1} parent=55 // pred_fallthru
          _
        %p427 = pneg %p58
        %p428 = pneg %p55
        %p429 = pneg %p79
        %p430 = pneg %p76
        %s431 = smul.u32 4, %s35
        %p432 = scmp.lt.s32.totalorder %s431, 7
        %s433 = scalar_select %p432, %s431, 7
        %s434 = smul.addr %s433, 2
        %s435 = smul.addr %s434, 4
        %s436 = scalar_lea.vmem %s2, %s435
        %p437 = pneg %p105
        %p438 = pneg %p102
        %s439 = sand.u32 %s118, 1
        %s440 = scalar_lea.sflag [#allocation5], %s439
        %s441 = sand.u32 %s118, 1
        %s442 = smul.addr %s441, 8
        %s443 = scalar_lea.vmem [#allocation4], %s442
        %p444 = pneg %p131
        %p445 = pneg %p128
        %s446 = sand.u32 %s30, 1
        %s447 = scalar_lea.sflag [#allocation8], %s446
        %s448 = sand.u32 %s144, 1
        %s449 = smul.addr %s448, 8
        %s450 = scalar_lea.vmem [#allocation7], %s449
        %p451 = pneg %p157
        %p452 = pneg %p154
        %s453 = sand.u32 %s30, 1
        %s454 = scalar_lea.sflag [#allocation8], %s453
        %s455 = sand.u32 %s170, 1
        %s456 = smul.addr %s455, 32
        %s457 = scalar_lea.vmem [#allocation9], %s456
        %p458 = pneg %p183
        %p459 = pneg %p180
        %p460 = pneg %p204
        %p461 = pneg %p201
        %p462 = pneg %p225
        %p463 = pneg %p222
        %p464 = pneg %p246
        %p465 = pneg %p243
        %p466 = pneg %p272
        %p467 = pneg %p269
        %s468 = sand.u32 %s259, 1
        %s469 = scalar_lea.sflag [#allocation6], %s468
        %s470 = sand.u32 %s259, 1
        %s471 = smul.addr %s470, 16
        %s472 = scalar_lea.vmem [#allocation12], %s471
        %s473 = smul.u32 4, %s35
        %p474 = scmp.lt.s32.totalorder %s473, 7
        %s475 = scalar_select %p474, %s473, 7
        %s476 = smul.addr %s475, 2
        %s477 = smul.addr %s476, 4
        %s478 = scalar_lea.vmem %s2, %s477
        %s479 = smul.u32 4, %s35
        %s480 = smul.u32 8, %s35
        %s481 = smul.u32 2, %s34
        %s483 = smul.u32 %s34, 16
        %p484 = scmp.eq.s32.totalorder %s35, 0
        // Predicated region
        $region73: #{tpu_custom_call.1} parent=55 // pred_check
          %p485 = pneg %p484
        $region74: #{tpu_custom_call.1} parent=55 // pred_check_branch
          %487 = sbr.rel (%p485) target = $region76
        $region75: #{tpu_custom_call.1} parent=55 // pred_region
          %v488 = vld [vmem:[%s0] sm:$0xff]
          %v489 = vld [vmem:[%s0 + $0x8] sm:$0xff]
          %v490 = vld [vmem:[%s0 + $0x10] sm:$0xff]
          %v491 = vld [vmem:[%s0 + $0x18] sm:$0xff]
          %v492 = vmul.f32 %v488, %v488
          %v493 = vmul.f32 %v489, %v489
          %v494 = vmul.f32 %v490, %v490
          %v495 = vmul.f32 %v491, %v491
          %496 = vadd.xlane.f32.xlu0 %v492
          %v497 = vpop.xlane.xlu0 %496
          %498 = vadd.xlane.f32.xlu0 %v493
          %v499 = vpop.xlane.xlu0 %498
          %500 = vadd.xlane.f32.xlu0 %v494
          %v501 = vpop.xlane.xlu0 %500
          %502 = vadd.xlane.f32.xlu0 %v495
          %v503 = vpop.xlane.xlu0 %502
          %v504 = vrcp.pop 128.0
          %v505 = vmul.f32 %v497, %v504
          %v506 = vmul.f32 %v499, %v504
          %v507 = vmul.f32 %v501, %v504
          %v508 = vmul.f32 %v503, %v504
          %v509 = vadd.f32 %v505, 1e-05
          %v510 = vadd.f32 %v506, 1e-05
          %v511 = vadd.f32 %v507, 1e-05
          %v512 = vadd.f32 %v508, 1e-05
          %v513 = vrsqrt.pop %v509
          %v514 = vrsqrt.pop %v510
          %v515 = vrsqrt.pop %v511
          %v516 = vrsqrt.pop %v512
          %v517 = vmul.f32 %v488, %v513
          %v518 = vmul.f32 %v489, %v514
          %v519 = vmul.f32 %v490, %v515
          %v520 = vmul.f32 %v491, %v516
          %v521 = vld [vmem:[%s1] sm:$0x1]
          %v523 = vlaneseq
          %v524 = vshrl.u32 %v523, 7
          %v525 = vsub.s32 0, %v524
          %v526 = vrot.slane %v521, %v525
          %v528 = vmul.f32 %v517, %v526
          %v529 = vmul.f32 %v518, %v526
          %v530 = vmul.f32 %v519, %v526
          %v531 = vmul.f32 %v520, %v526
          %v532 = vpack.c.bf16 %v529, %v528
          %v533 = vpack.c.bf16 %v531, %v530
          %534 = vst [vmem:[#allocation2] sm:$0xff] %v532
          %535 = vst [vmem:[#allocation2 + $0x8] sm:$0xff] %v533
          %s536 = scalar_lea.vmem %s0, %s483
          %v537 = vld [vmem:[%s536] sm:$0xff]
          %v538 = vld [vmem:[%s536 + $0x8] sm:$0xff]
          %539 = vst [vmem:[#allocation3] sm:$0xff] %v537
          %540 = vst [vmem:[#allocation3 + $0x8] sm:$0xff] %v538
        $region76: #{tpu_custom_call.1} parent=55 // pred_fallthru
          _
        %v541 = vld [vmem:[#allocation2] sm:$0xff]
        %v542 = vld [vmem:[#allocation2 + $0x8] sm:$0xff]
        %s543 = sshra.s32 %s483, 4
        %s544 = sand.u32 %s483, 15
        %s545 = smul.addr %s543, 8
        %s546 = scalar_lea.vmem [#allocation2], %s545
        %v547 = vld [vmem:[%s546] sm:$0xff]
        %v548 = vld [vmem:[#allocation10] sm:$0xff]
        %v549 = vld [vmem:[#allocation10 + $0x8] sm:$0xff]
        %v550 = vld [vmem:[%s6] sm:$0xff]
        %v551 = vld [vmem:[%s6 + $0x8] sm:$0xff]
        %v552 = vld [vmem:[%s6 + $0x10] sm:$0xff]
        %v553 = vld [vmem:[%s6 + $0x18] sm:$0xff]
        %v554 = vld [vmem:[%s7] sm:$0xff]
        %v555 = vld [vmem:[%s7 + $0x8] sm:$0xff]
        %v556 = vld [vmem:[%s7 + $0x10] sm:$0xff]
        %v557 = vld [vmem:[%s7 + $0x18] sm:$0xff]
        %s558 = scalar_lea.vmem %s6, %s483
        %v559 = vld [vmem:[%s558] sm:$0xff]
        %v560 = vld [vmem:[%s558 + $0x8] sm:$0xff]
        %s561 = scalar_lea.vmem %s7, %s483
        %v562 = vld [vmem:[%s561] sm:$0xff]
        %v563 = vld [vmem:[%s561 + $0x8] sm:$0xff]
        %v564 = vld [vmem:[%s400] sm:$0xf]
        %v565 = vld [vmem:[%s400 + $0x4] sm:$0xf]
        %v568 = vunpack.c.l.b16 %v564
        %v569 = vunpack.c.l.b16 %v565
        %v570 = vpack.c.b16 %v569, %v568
        %572 = vmatprep.subr.bf16.mxu0 0
        %573 = vmatpush1.bf16.xpose.msra.mxu0 %v570
        %574 = vmatprep.subr.bf16.mxu0 0
        %575 = vmatpush1.bf16.xpose.msra.mxu0 0
        %576 = vmatprep.subr.bf16.mxu0 0
        %577 = vmatpush1.bf16.xpose.msra.mxu0 0
        %578 = vmatprep.subr.bf16.mxu0 0
        %579 = vmatpush1.bf16.xpose.msra.mxu0 0
        %580 = vmatprep.subr.bf16.mxu0 0
        %581 = vmatpush1.bf16.xpose.msra.mxu0 0
        %582 = vmatprep.subr.bf16.mxu0 0
        %583 = vmatpush1.bf16.xpose.msra.mxu0 0
        %584 = vmatprep.subr.bf16.mxu0 0
        %585 = vmatpush1.bf16.xpose.msra.mxu0 0
        %586 = vmatprep.subr.bf16.mxu0 0
        %587 = vmatpush1.bf16.xpose.msra.mxu0 0
        %588 = vmatprep.subr.bf16.mxu0 0
        %589 = vmatpush1.bf16.xpose.msra.mxu0 0
        %590 = vmatprep.subr.bf16.mxu0 0
        %591 = vmatpush1.bf16.xpose.msra.mxu0 0
        %592 = vmatprep.subr.bf16.mxu0 0
        %593 = vmatpush1.bf16.xpose.msra.mxu0 0
        %594 = vmatprep.subr.bf16.mxu0 0
        %595 = vmatpush1.bf16.xpose.msra.mxu0 0
        %596 = vmatprep.subr.bf16.mxu0 0
        %597 = vmatpush1.bf16.xpose.msra.mxu0 0
        %598 = vmatprep.subr.bf16.mxu0 0
        %599 = vmatpush1.bf16.xpose.msra.mxu0 0
        %600 = vmatprep.subr.bf16.mxu0 0
        %601 = vmatpush1.bf16.xpose.msra.mxu0 0
        %602 = vmatprep.subr.bf16.mxu0 0
        %603 = vmatpush1.bf16.xpose.msra.mxu0 0
        %604 = vmatprep.mubr.bf16.mxu0 0
        %605 = vmatmul.mubr.bf16.gmra.mrb[0].mxu0 %v541
        %v606 = vpop.f32.mrb[0].mxu0
        %v607 = vadd.f32 0.0, %v606
        %v608 = vpop.f32.mrb[0].mxu0
        %v609 = vpop.f32.mrb[0].mxu0
        %v610 = vadd.f32 0.0, %v609
        %v611 = vpop.f32.mrb[0].mxu0
        %612 = vmatprep.mubr.bf16.mxu0 0
        %613 = vmatmul.mubr.bf16.gmra.mrb[0].mxu0 %v542
        %v614 = vpop.f32.mrb[0].mxu0
        %v615 = vadd.f32 0.0, %v614
        %v616 = vpop.f32.mrb[0].mxu0
        %v617 = vpop.f32.mrb[0].mxu0
        %v618 = vadd.f32 0.0, %v617
        %v619 = vpop.f32.mrb[0].mxu0
        %620 = vdwg.mxu0
        %v621 = vld [vmem:[%s409] sm:$0xf]
        %v622 = vld [vmem:[%s409 + $0x4] sm:$0xf]
        %v625 = vunpack.c.l.b16 %v621
        %v626 = vunpack.c.l.b16 %v622
        %v627 = vpack.c.b16 %v626, %v625
        %629 = vmatprep.subr.bf16.mxu0 0
        %630 = vmatpush1.bf16.xpose.msra.mxu0 %v627
        %631 = vmatprep.subr.bf16.mxu0 0
        %632 = vmatpush1.bf16.xpose.msra.mxu0 0
        %633 = vmatprep.subr.bf16.mxu0 0
        %634 = vmatpush1.bf16.xpose.msra.mxu0 0
        %635 = vmatprep.subr.bf16.mxu0 0
        %636 = vmatpush1.bf16.xpose.msra.mxu0 0
        %637 = vmatprep.subr.bf16.mxu0 0
        %638 = vmatpush1.bf16.xpose.msra.mxu0 0
        %639 = vmatprep.subr.bf16.mxu0 0
        %640 = vmatpush1.bf16.xpose.msra.mxu0 0
        %641 = vmatprep.subr.bf16.mxu0 0
        %642 = vmatpush1.bf16.xpose.msra.mxu0 0
        %643 = vmatprep.subr.bf16.mxu0 0
        %644 = vmatpush1.bf16.xpose.msra.mxu0 0
        %645 = vmatprep.subr.bf16.mxu0 0
        %646 = vmatpush1.bf16.xpose.msra.mxu0 0
        %647 = vmatprep.subr.bf16.mxu0 0
        %648 = vmatpush1.bf16.xpose.msra.mxu0 0
        %649 = vmatprep.subr.bf16.mxu0 0
        %650 = vmatpush1.bf16.xpose.msra.mxu0 0
        %651 = vmatprep.subr.bf16.mxu0 0
        %652 = vmatpush1.bf16.xpose.msra.mxu0 0
        %653 = vmatprep.subr.bf16.mxu0 0
        %654 = vmatpush1.bf16.xpose.msra.mxu0 0
        %655 = vmatprep.subr.bf16.mxu0 0
        %656 = vmatpush1.bf16.xpose.msra.mxu0 0
        %657 = vmatprep.subr.bf16.mxu0 0
        %658 = vmatpush1.bf16.xpose.msra.mxu0 0
        %659 = vmatprep.subr.bf16.mxu0 0
        %660 = vmatpush1.bf16.xpose.msra.mxu0 0
        %661 = vmatprep.mubr.bf16.mxu0 0
        %662 = vmatmul.mubr.bf16.gmra.mrb[0].mxu0 %v541
        %v663 = vpop.f32.mrb[0].mxu0
        %v664 = vadd.f32 0.0, %v663
        %v665 = vpop.f32.mrb[0].mxu0
        %v666 = vpop.f32.mrb[0].mxu0
        %v667 = vadd.f32 0.0, %v666
        %v668 = vpop.f32.mrb[0].mxu0
        %669 = vmatprep.mubr.bf16.mxu0 0
        %670 = vmatmul.mubr.bf16.gmra.mrb[0].mxu0 %v542
        %v671 = vpop.f32.mrb[0].mxu0
        %v672 = vadd.f32 0.0, %v671
        %v673 = vpop.f32.mrb[0].mxu0
        %v674 = vpop.f32.mrb[0].mxu0
        %v675 = vadd.f32 0.0, %v674
        %v676 = vpop.f32.mrb[0].mxu0
        %677 = vdwg.mxu0
        %v678 = vmul.f32 %v607, %v550
        %v679 = vmul.f32 %v610, %v551
        %v680 = vmul.f32 %v615, %v552
        %v681 = vmul.f32 %v618, %v553
        %vm682 = vcmask 130048
        %v684 = vsel %vm682, %v607, 0
        %v687 = vsel %vm682, %v610, 0
        %v690 = vsel %vm682, %v615, 0
        %v693 = vsel %vm682, %v618, 0
        %695 = vmatprep.subr.mxu0 0.0
        %696 = vmatpush1.msra.mxu0 %v548
        %697 = vmatprep.subr.mxu0 0.0
        %698 = vmatpush1.msra.mxu0 %v549
        %699 = vmatprep.subr.mxu0 0.0
        %700 = vmatpush1.msra.mxu0 0.0
        %701 = vmatprep.subr.mxu0 0.0
        %702 = vmatpush1.msra.mxu0 0.0
        %703 = vmatprep.subr.mxu0 0.0
        %704 = vmatpush1.msra.mxu0 0.0
        %705 = vmatprep.subr.mxu0 0.0
        %706 = vmatpush1.msra.mxu0 0.0
        %707 = vmatprep.subr.mxu0 0.0
        %708 = vmatpush1.msra.mxu0 0.0
        %709 = vmatprep.subr.mxu0 0.0
        %710 = vmatpush1.msra.mxu0 0.0
        %711 = vmatprep.subr.mxu0 0.0
        %712 = vmatpush1.msra.mxu0 0.0
        %713 = vmatprep.subr.mxu0 0.0
        %714 = vmatpush1.msra.mxu0 0.0
        %715 = vmatprep.subr.mxu0 0.0
        %716 = vmatpush1.msra.mxu0 0.0
        %717 = vmatprep.subr.mxu0 0.0
        %718 = vmatpush1.msra.mxu0 0.0
        %719 = vmatprep.subr.mxu0 0.0
        %720 = vmatpush1.msra.mxu0 0.0
        %721 = vmatprep.subr.mxu0 0.0
        %722 = vmatpush1.msra.mxu0 0.0
        %723 = vmatprep.subr.mxu0 0.0
        %724 = vmatpush1.msra.mxu0 0.0
        %725 = vmatprep.subr.mxu0 0.0
        %726 = vmatpush1.msra.mxu0 0.0
        %727 = vmatprep.subr.mxu0 0.0
        %728 = vmatpush1.msra.mxu0 0.0
        %729 = vmatprep.subr.mxu0 0.0
        %730 = vmatpush1.msra.mxu0 0.0
        %731 = vmatprep.subr.mxu0 0.0
        %732 = vmatpush1.msra.mxu0 0.0
        %733 = vmatprep.subr.mxu0 0.0
        %734 = vmatpush1.msra.mxu0 0.0
        %735 = vmatprep.subr.mxu0 0.0
        %736 = vmatpush1.msra.mxu0 0.0
        %737 = vmatprep.subr.mxu0 0.0
        %738 = vmatpush1.msra.mxu0 0.0
        %739 = vmatprep.subr.mxu0 0.0
        %740 = vmatpush1.msra.mxu0 0.0
        %741 = vmatprep.subr.mxu0 0.0
        %742 = vmatpush1.msra.mxu0 0.0
        %743 = vmatprep.subr.mxu0 0.0
        %744 = vmatpush1.msra.mxu0 0.0
        %745 = vmatprep.subr.mxu0 0.0
        %746 = vmatpush1.msra.mxu0 0.0
        %747 = vmatprep.subr.mxu0 0.0
        %748 = vmatpush1.msra.mxu0 0.0
        %749 = vmatprep.subr.mxu0 0.0
        %750 = vmatpush1.msra.mxu0 0.0
        %751 = vmatprep.subr.mxu0 0.0
        %752 = vmatpush1.msra.mxu0 0.0
        %753 = vmatprep.subr.mxu0 0.0
        %754 = vmatpush1.msra.mxu0 0.0
        %755 = vmatprep.subr.mxu0 0.0
        %756 = vmatpush1.msra.mxu0 0.0
        %757 = vmatprep.subr.mxu0 0.0
        %758 = vmatpush1.msra.mxu0 0.0
        %759 = vmatprep.mubr.f32.mxu0 0.0
        %760 = vmatmul.mubr.f32.gmra.mrb[0].mxu0 %v684
        %v761 = vpop.f32.mrb[0].mxu0
        %v762 = vadd.f32 0.0, %v761
        %v763 = vpop.f32.mrb[0].mxu0
        %764 = vmatprep.mubr.f32.mxu0 0.0
        %765 = vmatmul.mubr.f32.gmra.mrb[0].mxu0 %v687
        %v766 = vpop.f32.mrb[0].mxu0
        %v767 = vadd.f32 0.0, %v766
        %v768 = vpop.f32.mrb[0].mxu0
        %769 = vmatprep.mubr.f32.mxu0 0.0
        %770 = vmatmul.mubr.f32.gmra.mrb[0].mxu0 %v690
        %v771 = vpop.f32.mrb[0].mxu0
        %v772 = vadd.f32 0.0, %v771
        %v773 = vpop.f32.mrb[0].mxu0
        %774 = vmatprep.mubr.f32.mxu0 0.0
        %775 = vmatmul.mubr.f32.gmra.mrb[0].mxu0 %v693
        %v776 = vpop.f32.mrb[0].mxu0
        %v777 = vadd.f32 0.0, %v776
        %v778 = vpop.f32.mrb[0].mxu0
        %779 = vdwg.mxu0
        %v780 = vmul.f32 %v762, %v554
        %v781 = vmul.f32 %v767, %v555
        %v782 = vmul.f32 %v772, %v556
        %v783 = vmul.f32 %v777, %v557
        %v784 = vadd.f32 %v678, %v780
        %v785 = vadd.f32 %v679, %v781
        %v786 = vadd.f32 %v680, %v782
        %v787 = vadd.f32 %v681, %v783
        %v788 = vpack.c.bf16 %v785, %v784
        %v789 = vpack.c.bf16 %v787, %v786
        %v790 = vpack.c.bf16 %v667, %v664
        %v791 = vpack.c.bf16 %v675, %v672
        %v792 = vlaneseq
        %v793 = vshrl.u32 %v792, 7
        %v794 = vadd.s32 %v793, 8
        %v795 = vstv %s483
        %v796 = vadd.s32 %v795, %v793
        %v797 = vadd.s32 %v795, %v794
        %v798 = vlaneseq
        %v799 = vand.u32 %v798, 127
        %v800 = vld [vmem:[%s478] sm:$0xf]
        %v801 = vld [vmem:[%s478 + $0x4] sm:$0xf]
        %v804 = vunpack.c.l.b16 %v800
        %v805 = vunpack.c.l.b16 %v801
        %v806 = vpack.c.b16 %v805, %v804
        %808 = vmatprep.subr.bf16.mxu0 0
        %809 = vmatpush1.bf16.xpose.msra.mxu0 %v806
        %810 = vmatprep.subr.bf16.mxu0 0
        %811 = vmatpush1.bf16.xpose.msra.mxu0 0
        %812 = vmatprep.subr.bf16.mxu0 0
        %813 = vmatpush1.bf16.xpose.msra.mxu0 0
        %814 = vmatprep.subr.bf16.mxu0 0
        %815 = vmatpush1.bf16.xpose.msra.mxu0 0
        %816 = vmatprep.subr.bf16.mxu0 0
        %817 = vmatpush1.bf16.xpose.msra.mxu0 0
        %818 = vmatprep.subr.bf16.mxu0 0
        %819 = vmatpush1.bf16.xpose.msra.mxu0 0
        %820 = vmatprep.subr.bf16.mxu0 0
        %821 = vmatpush1.bf16.xpose.msra.mxu0 0
        %822 = vmatprep.subr.bf16.mxu0 0
        %823 = vmatpush1.bf16.xpose.msra.mxu0 0
        %824 = vmatprep.subr.bf16.mxu0 0
        %825 = vmatpush1.bf16.xpose.msra.mxu0 0
        %826 = vmatprep.subr.bf16.mxu0 0
        %827 = vmatpush1.bf16.xpose.msra.mxu0 0
        %828 = vmatprep.subr.bf16.mxu0 0
        %829 = vmatpush1.bf16.xpose.msra.mxu0 0
        %830 = vmatprep.subr.bf16.mxu0 0
        %831 = vmatpush1.bf16.xpose.msra.mxu0 0
        %832 = vmatprep.subr.bf16.mxu0 0
        %833 = vmatpush1.bf16.xpose.msra.mxu0 0
        %834 = vmatprep.subr.bf16.mxu0 0
        %835 = vmatpush1.bf16.xpose.msra.mxu0 0
        %836 = vmatprep.subr.bf16.mxu0 0
        %837 = vmatpush1.bf16.xpose.msra.mxu0 0
        %838 = vmatprep.subr.bf16.mxu0 0
        %839 = vmatpush1.bf16.xpose.msra.mxu0 0
        %840 = vmatprep.mubr.bf16.mxu0 0
        %841 = vmatmul.mubr.bf16.gmra.mrb[0].mxu0 %v547
        %v842 = vpop.f32.mrb[0].mxu0
        %v843 = vadd.f32 0.0, %v842
        %v844 = vpop.f32.mrb[0].mxu0
        %v845 = vpop.f32.mrb[0].mxu0
        %v846 = vadd.f32 0.0, %v845
        %v847 = vpop.f32.mrb[0].mxu0
        %848 = vdwg.mxu0
        %v849 = vmul.f32 %v843, %v559
        %v850 = vmul.f32 %v846, %v560
        %v852 = vsel %vm682, %v843, 0
        %v855 = vsel %vm682, %v846, 0
        %857 = vmatprep.subr.mxu0 0.0
        %858 = vmatpush1.msra.mxu0 %v548
        %859 = vmatprep.subr.mxu0 0.0
        %860 = vmatpush1.msra.mxu0 %v549
        %861 = vmatprep.subr.mxu0 0.0
        %862 = vmatpush1.msra.mxu0 0.0
        %863 = vmatprep.subr.mxu0 0.0
        %864 = vmatpush1.msra.mxu0 0.0
        %865 = vmatprep.subr.mxu0 0.0
        %866 = vmatpush1.msra.mxu0 0.0
        %867 = vmatprep.subr.mxu0 0.0
        %868 = vmatpush1.msra.mxu0 0.0
        %869 = vmatprep.subr.mxu0 0.0
        %870 = vmatpush1.msra.mxu0 0.0
        %871 = vmatprep.subr.mxu0 0.0
        %872 = vmatpush1.msra.mxu0 0.0
        %873 = vmatprep.subr.mxu0 0.0
        %874 = vmatpush1.msra.mxu0 0.0
        %875 = vmatprep.subr.mxu0 0.0
        %876 = vmatpush1.msra.mxu0 0.0
        %877 = vmatprep.subr.mxu0 0.0
        %878 = vmatpush1.msra.mxu0 0.0
        %879 = vmatprep.subr.mxu0 0.0
        %880 = vmatpush1.msra.mxu0 0.0
        %881 = vmatprep.subr.mxu0 0.0
        %882 = vmatpush1.msra.mxu0 0.0
        %883 = vmatprep.subr.mxu0 0.0
        %884 = vmatpush1.msra.mxu0 0.0
        %885 = vmatprep.subr.mxu0 0.0
        %886 = vmatpush1.msra.mxu0 0.0
        %887 = vmatprep.subr.mxu0 0.0
        %888 = vmatpush1.msra.mxu0 0.0
        %889 = vmatprep.subr.mxu0 0.0
        %890 = vmatpush1.msra.mxu0 0.0
        %891 = vmatprep.subr.mxu0 0.0
        %892 = vmatpush1.msra.mxu0 0.0
        %893 = vmatprep.subr.mxu0 0.0
        %894 = vmatpush1.msra.mxu0 0.0
        %895 = vmatprep.subr.mxu0 0.0
        %896 = vmatpush1.msra.mxu0 0.0
        %897 = vmatprep.subr.mxu0 0.0
        %898 = vmatpush1.msra.mxu0 0.0
        %899 = vmatprep.subr.mxu0 0.0
        %900 = vmatpush1.msra.mxu0 0.0
        %901 = vmatprep.subr.mxu0 0.0
        %902 = vmatpush1.msra.mxu0 0.0
        %903 = vmatprep.subr.mxu0 0.0
        %904 = vmatpush1.msra.mxu0 0.0
        %905 = vmatprep.subr.mxu0 0.0
        %906 = vmatpush1.msra.mxu0 0.0
        %907 = vmatprep.subr.mxu0 0.0
        %908 = vmatpush1.msra.mxu0 0.0
        %909 = vmatprep.subr.mxu0 0.0
        %910 = vmatpush1.msra.mxu0 0.0
        %911 = vmatprep.subr.mxu0 0.0
        %912 = vmatpush1.msra.mxu0 0.0
        %913 = vmatprep.subr.mxu0 0.0
        %914 = vmatpush1.msra.mxu0 0.0
        %915 = vmatprep.subr.mxu0 0.0
        %916 = vmatpush1.msra.mxu0 0.0
        %917 = vmatprep.subr.mxu0 0.0
        %918 = vmatpush1.msra.mxu0 0.0
        %919 = vmatprep.subr.mxu0 0.0
        %920 = vmatpush1.msra.mxu0 0.0
        %921 = vmatprep.mubr.f32.mxu0 0.0
        %922 = vmatmul.mubr.f32.gmra.mrb[0].mxu0 %v852
        %v923 = vpop.f32.mrb[0].mxu0
        %v924 = vadd.f32 0.0, %v923
        %v925 = vpop.f32.mrb[0].mxu0
        %926 = vmatprep.mubr.f32.mxu0 0.0
        %927 = vmatmul.mubr.f32.gmra.mrb[0].mxu0 %v855
        %v928 = vpop.f32.mrb[0].mxu0
        %v929 = vadd.f32 0.0, %v928
        %v930 = vpop.f32.mrb[0].mxu0
        %931 = vdwg.mxu0
        %v932 = vmul.f32 %v924, %v562
        %v933 = vmul.f32 %v929, %v563
        %v934 = vadd.f32 %v849, %v932
        %v935 = vadd.f32 %v850, %v933
        %v936 = vpack.c.bf16 %v935, %v934
        %v938 = vsel %vm682, %v936, 0
        %v941 = vsel %vm682, %v788, 0
        %v944 = vsel %vm682, %v789, 0
        %946 = vmatprep.subr.bf16.mxu0 0
        %947 = vmatpush1.bf16.xpose.msra.mxu0 %v941
        %948 = vmatprep.subr.bf16.mxu0 0
        %949 = vmatpush1.bf16.xpose.msra.mxu0 %v944
        %950 = vmatprep.subr.bf16.mxu0 0
        %951 = vmatpush1.bf16.xpose.msra.mxu0 0
        %952 = vmatprep.subr.bf16.mxu0 0
        %953 = vmatpush1.bf16.xpose.msra.mxu0 0
        %954 = vmatprep.subr.bf16.mxu0 0
        %955 = vmatpush1.bf16.xpose.msra.mxu0 0
        %956 = vmatprep.subr.bf16.mxu0 0
        %957 = vmatpush1.bf16.xpose.msra.mxu0 0
        %958 = vmatprep.subr.bf16.mxu0 0
        %959 = vmatpush1.bf16.xpose.msra.mxu0 0
        %960 = vmatprep.subr.bf16.mxu0 0
        %961 = vmatpush1.bf16.xpose.msra.mxu0 0
        %962 = vmatprep.subr.bf16.mxu0 0
        %963 = vmatpush1.bf16.xpose.msra.mxu0 0
        %964 = vmatprep.subr.bf16.mxu0 0
        %965 = vmatpush1.bf16.xpose.msra.mxu0 0
        %966 = vmatprep.subr.bf16.mxu0 0
        %967 = vmatpush1.bf16.xpose.msra.mxu0 0
        %968 = vmatprep.subr.bf16.mxu0 0
        %969 = vmatpush1.bf16.xpose.msra.mxu0 0
        %970 = vmatprep.subr.bf16.mxu0 0
        %971 = vmatpush1.bf16.xpose.msra.mxu0 0
        %972 = vmatprep.subr.bf16.mxu0 0
        %973 = vmatpush1.bf16.xpose.msra.mxu0 0
        %974 = vmatprep.subr.bf16.mxu0 0
        %975 = vmatpush1.bf16.xpose.msra.mxu0 0
        %976 = vmatprep.subr.bf16.mxu0 0
        %977 = vmatpush1.bf16.xpose.msra.mxu0 0
        %978 = vmatprep.mubr.bf16.mxu0 0
        %979 = vmatmul.mubr.bf16.gmra.mrb[0].mxu0 %v938
        %v980 = vpop.f32.mrb[0].mxu0
        %v981 = vadd.f32 0.0, %v980
        %v982 = vpop.f32.mrb[0].mxu0
        %v983 = vpop.f32.mrb[0].mxu0
        %v984 = vadd.f32 0.0, %v983
        %v985 = vpop.f32.mrb[0].mxu0
        %986 = vdwg.mxu0
        %v987 = vmul.f32 %v981, 0.25
        %v988 = vmul.f32 %v984, 0.25
        %vm989 = vcmp.gt.s32.totalorder %v799, %v796
        %vm990 = vcmp.gt.s32.totalorder %v799, %v797
        %v991 = vsel %vm989, -inf, %v987
        %v992 = vsel %vm990, -inf, %v988
        %vm993 = vcmask 261120
        %v994 = vsel %vm993, %v991, -inf
        %995 = vmax.xlane.f32.xlu0 %v994
        %v996 = vpop.xlane.xlu0 %995
        %v997 = vsel %vm993, %v992, -inf
        %998 = vmax.xlane.f32.xlu0 %v997
        %v999 = vpop.xlane.xlu0 %998
        %v1000 = vsub.f32 %v991, %v996
        %v1001 = vsub.f32 %v992, %v999
        %v1002 = vmul.f32 %v1000, 1.442695
        %v1003 = vpow.pop %v1002
        %v1004 = vmul.f32 %v1001, 1.442695
        %v1005 = vpow.pop %v1004
        %v1006 = vsel %vm993, %v1003, 0.0
        %1007 = vadd.xlane.f32.xlu0 %v1006
        %v1008 = vpop.xlane.xlu0 %1007
        %v1009 = vsel %vm993, %v1005, 0.0
        %1010 = vadd.xlane.f32.xlu0 %v1009
        %v1011 = vpop.xlane.xlu0 %1010
        %v1012 = vrcp.pop %v1008
        %v1013 = vrcp.pop %v1011
        %v1014 = vmul.f32 %v1003, %v1012
        %v1015 = vmul.f32 %v1005, %v1013
        %v1016 = vpack.c.bf16 %v1015, %v1014
        %v1018 = vsel %vm993, %v1016, 0
        %1020 = vmatprep.subr.bf16.mxu0 0
        %1021 = vmatpush1.bf16.msra.mxu0 %v790
        %1022 = vmatprep.subr.bf16.mxu0 0
        %1023 = vmatpush1.bf16.msra.mxu0 %v791
        %1024 = vmatprep.subr.bf16.mxu0 0
        %1025 = vmatpush1.bf16.msra.mxu0 0
        %1026 = vmatprep.subr.bf16.mxu0 0
        %1027 = vmatpush1.bf16.msra.mxu0 0
        %1028 = vmatprep.subr.bf16.mxu0 0
        %1029 = vmatpush1.bf16.msra.mxu0 0
        %1030 = vmatprep.subr.bf16.mxu0 0
        %1031 = vmatpush1.bf16.msra.mxu0 0
        %1032 = vmatprep.subr.bf16.mxu0 0
        %1033 = vmatpush1.bf16.msra.mxu0 0
        %1034 = vmatprep.subr.bf16.mxu0 0
        %1035 = vmatpush1.bf16.msra.mxu0 0
        %1036 = vmatprep.subr.bf16.mxu0 0
        %1037 = vmatpush1.bf16.msra.mxu0 0
        %1038 = vmatprep.subr.bf16.mxu0 0
        %1039 = vmatpush1.bf16.msra.mxu0 0
        %1040 = vmatprep.subr.bf16.mxu0 0
        %1041 = vmatpush1.bf16.msra.mxu0 0
        %1042 = vmatprep.subr.bf16.mxu0 0
        %1043 = vmatpush1.bf16.msra.mxu0 0
        %1044 = vmatprep.subr.bf16.mxu0 0
        %1045 = vmatpush1.bf16.msra.mxu0 0
        %1046 = vmatprep.subr.bf16.mxu0 0
        %1047 = vmatpush1.bf16.msra.mxu0 0
        %1048 = vmatprep.subr.bf16.mxu0 0
        %1049 = vmatpush1.bf16.msra.mxu0 0
        %1050 = vmatprep.subr.bf16.mxu0 0
        %1051 = vmatpush1.bf16.msra.mxu0 0
        %1052 = vmatprep.mubr.bf16.mxu0 0
        %1053 = vmatmul.mubr.bf16.gmra.mrb[0].mxu0 %v1018
        %v1054 = vpop.f32.mrb[0].mxu0
        %v1055 = vadd.f32 0.0, %v1054
        %v1056 = vpop.f32.mrb[0].mxu0
        %v1057 = vpop.f32.mrb[0].mxu0
        %v1058 = vadd.f32 0.0, %v1057
        %v1059 = vpop.f32.mrb[0].mxu0
        %1060 = vdwg.mxu0
        %s1061 = scalar_lea.vmem %s478, 8
        %v1062 = vld [vmem:[%s1061] sm:$0xf]
        %v1063 = vld [vmem:[%s1061 + $0x4] sm:$0xf]
        %v1066 = vunpack.c.l.b16 %v1062
        %v1067 = vunpack.c.l.b16 %v1063
        %v1068 = vpack.c.b16 %v1067, %v1066
        %1070 = vmatprep.subr.bf16.mxu0 0
        %1071 = vmatpush1.bf16.xpose.msra.mxu0 %v1068
        %1072 = vmatprep.subr.bf16.mxu0 0
        %1073 = vmatpush1.bf16.xpose.msra.mxu0 0
        %1074 = vmatprep.subr.bf16.mxu0 0
        %1075 = vmatpush1.bf16.xpose.msra.mxu0 0
        %1076 = vmatprep.subr.bf16.mxu0 0
        %1077 = vmatpush1.bf16.xpose.msra.mxu0 0
        %1078 = vmatprep.subr.bf16.mxu0 0
        %1079 = vmatpush1.bf16.xpose.msra.mxu0 0
        %1080 = vmatprep.subr.bf16.mxu0 0
        %1081 = vmatpush1.bf16.xpose.msra.mxu0 0
        %1082 = vmatprep.subr.bf16.mxu0 0
        %1083 = vmatpush1.bf16.xpose.msra.mxu0 0
        %1084 = vmatprep.subr.bf16.mxu0 0
        %1085 = vmatpush1.bf16.xpose.msra.mxu0 0
        %1086 = vmatprep.subr.bf16.mxu0 0
        %1087 = vmatpush1.bf16.xpose.msra.mxu0 0
        %1088 = vmatprep.subr.bf16.mxu0 0
        %1089 = vmatpush1.bf16.xpose.msra.mxu0 0
        %1090 = vmatprep.subr.bf16.mxu0 0
        %1091 = vmatpush1.bf16.xpose.msra.mxu0 0
        %1092 = vmatprep.subr.bf16.mxu0 0
        %1093 = vmatpush1.bf16.xpose.msra.mxu0 0
        %1094 = vmatprep.subr.bf16.mxu0 0
        %1095 = vmatpush1.bf16.xpose.msra.mxu0 0
        %1096 = vmatprep.subr.bf16.mxu0 0
        %1097 = vmatpush1.bf16.xpose.msra.mxu0 0
        %1098 = vmatprep.subr.bf16.mxu0 0
        %1099 = vmatpush1.bf16.xpose.msra.mxu0 0
        %1100 = vmatprep.subr.bf16.mxu0 0
        %1101 = vmatpush1.bf16.xpose.msra.mxu0 0
        %1102 = vmatprep.mubr.bf16.mxu0 0
        %1103 = vmatmul.mubr.bf16.gmra.mrb[0].mxu0 %v547
        %v1104 = vpop.f32.mrb[0].mxu0
        %v1105 = vadd.f32 0.0, %v1104
        %v1106 = vpop.f32.mrb[0].mxu0
        %v1107 = vpop.f32.mrb[0].mxu0
        %v1108 = vadd.f32 0.0, %v1107
        %v1109 = vpop.f32.mrb[0].mxu0
        %1110 = vdwg.mxu0
        %v1111 = vmul.f32 %v1105, %v559
        %v1112 = vmul.f32 %v1108, %v560
        %v1114 = vsel %vm682, %v1105, 0
        %v1117 = vsel %vm682, %v1108, 0
        %1119 = vmatprep.subr.mxu0 0.0
        %1120 = vmatpush1.msra.mxu0 %v548
        %1121 = vmatprep.subr.mxu0 0.0
        %1122 = vmatpush1.msra.mxu0 %v549
        %1123 = vmatprep.subr.mxu0 0.0
        %1124 = vmatpush1.msra.mxu0 0.0
        %1125 = vmatprep.subr.mxu0 0.0
        %1126 = vmatpush1.msra.mxu0 0.0
        %1127 = vmatprep.subr.mxu0 0.0
        %1128 = vmatpush1.msra.mxu0 0.0
        %1129 = vmatprep.subr.mxu0 0.0
        %1130 = vmatpush1.msra.mxu0 0.0
        %1131 = vmatprep.subr.mxu0 0.0
        %1132 = vmatpush1.msra.mxu0 0.0
        %1133 = vmatprep.subr.mxu0 0.0
        %1134 = vmatpush1.msra.mxu0 0.0
        %1135 = vmatprep.subr.mxu0 0.0
        %1136 = vmatpush1.msra.mxu0 0.0
        %1137 = vmatprep.subr.mxu0 0.0
        %1138 = vmatpush1.msra.mxu0 0.0
        %1139 = vmatprep.subr.mxu0 0.0
        %1140 = vmatpush1.msra.mxu0 0.0
        %1141 = vmatprep.subr.mxu0 0.0
        %1142 = vmatpush1.msra.mxu0 0.0
        %1143 = vmatprep.subr.mxu0 0.0
        %1144 = vmatpush1.msra.mxu0 0.0
        %1145 = vmatprep.subr.mxu0 0.0
        %1146 = vmatpush1.msra.mxu0 0.0
        %1147 = vmatprep.subr.mxu0 0.0
        %1148 = vmatpush1.msra.mxu0 0.0
        %1149 = vmatprep.subr.mxu0 0.0
        %1150 = vmatpush1.msra.mxu0 0.0
        %1151 = vmatprep.subr.mxu0 0.0
        %1152 = vmatpush1.msra.mxu0 0.0
        %1153 = vmatprep.subr.mxu0 0.0
        %1154 = vmatpush1.msra.mxu0 0.0
        %1155 = vmatprep.subr.mxu0 0.0
        %1156 = vmatpush1.msra.mxu0 0.0
        %1157 = vmatprep.subr.mxu0 0.0
        %1158 = vmatpush1.msra.mxu0 0.0
        %1159 = vmatprep.subr.mxu0 0.0
        %1160 = vmatpush1.msra.mxu0 0.0
        %1161 = vmatprep.subr.mxu0 0.0
        %1162 = vmatpush1.msra.mxu0 0.0
        %1163 = vmatprep.subr.mxu0 0.0
        %1164 = vmatpush1.msra.mxu0 0.0
        %1165 = vmatprep.subr.mxu0 0.0
        %1166 = vmatpush1.msra.mxu0 0.0
        %1167 = vmatprep.subr.mxu0 0.0
        %1168 = vmatpush1.msra.mxu0 0.0
        %1169 = vmatprep.subr.mxu0 0.0
        %1170 = vmatpush1.msra.mxu0 0.0
        %1171 = vmatprep.subr.mxu0 0.0
        %1172 = vmatpush1.msra.mxu0 0.0
        %1173 = vmatprep.subr.mxu0 0.0
        %1174 = vmatpush1.msra.mxu0 0.0
        %1175 = vmatprep.subr.mxu0 0.0
        %1176 = vmatpush1.msra.mxu0 0.0
        %1177 = vmatprep.subr.mxu0 0.0
        %1178 = vmatpush1.msra.mxu0 0.0
        %1179 = vmatprep.subr.mxu0 0.0
        %1180 = vmatpush1.msra.mxu0 0.0
        %1181 = vmatprep.subr.mxu0 0.0
        %1182 = vmatpush1.msra.mxu0 0.0
        %1183 = vmatprep.mubr.f32.mxu0 0.0
        %1184 = vmatmul.mubr.f32.gmra.mrb[0].mxu0 %v1114
        %v1185 = vpop.f32.mrb[0].mxu0
        %v1186 = vadd.f32 0.0, %v1185
        %v1187 = vpop.f32.mrb[0].mxu0
        %1188 = vmatprep.mubr.f32.mxu0 0.0
        %1189 = vmatmul.mubr.f32.gmra.mrb[0].mxu0 %v1117
        %v1190 = vpop.f32.mrb[0].mxu0
        %v1191 = vadd.f32 0.0, %v1190
        %v1192 = vpop.f32.mrb[0].mxu0
        %1193 = vdwg.mxu0
        %v1194 = vmul.f32 %v1186, %v562
        %v1195 = vmul.f32 %v1191, %v563
        %v1196 = vadd.f32 %v1111, %v1194
        %v1197 = vadd.f32 %v1112, %v1195
        %v1198 = vpack.c.bf16 %v1197, %v1196
        %v1200 = vsel %vm682, %v1198, 0
        %1202 = vmatprep.subr.bf16.mxu0 0
        %1203 = vmatpush1.bf16.xpose.msra.mxu0 %v941
        %1204 = vmatprep.subr.bf16.mxu0 0
        %1205 = vmatpush1.bf16.xpose.msra.mxu0 %v944
        %1206 = vmatprep.subr.bf16.mxu0 0
        %1207 = vmatpush1.bf16.xpose.msra.mxu0 0
        %1208 = vmatprep.subr.bf16.mxu0 0
        %1209 = vmatpush1.bf16.xpose.msra.mxu0 0
        %1210 = vmatprep.subr.bf16.mxu0 0
        %1211 = vmatpush1.bf16.xpose.msra.mxu0 0
        %1212 = vmatprep.subr.bf16.mxu0 0
        %1213 = vmatpush1.bf16.xpose.msra.mxu0 0
        %1214 = vmatprep.subr.bf16.mxu0 0
        %1215 = vmatpush1.bf16.xpose.msra.mxu0 0
        %1216 = vmatprep.subr.bf16.mxu0 0
        %1217 = vmatpush1.bf16.xpose.msra.mxu0 0
        %1218 = vmatprep.subr.bf16.mxu0 0
        %1219 = vmatpush1.bf16.xpose.msra.mxu0 0
        %1220 = vmatprep.subr.bf16.mxu0 0
        %1221 = vmatpush1.bf16.xpose.msra.mxu0 0
        %1222 = vmatprep.subr.bf16.mxu0 0
        %1223 = vmatpush1.bf16.xpose.msra.mxu0 0
        %1224 = vmatprep.subr.bf16.mxu0 0
        %1225 = vmatpush1.bf16.xpose.msra.mxu0 0
        %1226 = vmatprep.subr.bf16.mxu0 0
        %1227 = vmatpush1.bf16.xpose.msra.mxu0 0
        %1228 = vmatprep.subr.bf16.mxu0 0
        %1229 = vmatpush1.bf16.xpose.msra.mxu0 0
        %1230 = vmatprep.subr.bf16.mxu0 0
        %1231 = vmatpush1.bf16.xpose.msra.mxu0 0
        %1232 = vmatprep.subr.bf16.mxu0 0
        %1233 = vmatpush1.bf16.xpose.msra.mxu0 0
        %1234 = vmatprep.mubr.bf16.mxu0 0
        %1235 = vmatmul.mubr.bf16.gmra.mrb[0].mxu0 %v1200
        %v1236 = vpop.f32.mrb[0].mxu0
        %v1237 = vadd.f32 0.0, %v1236
        %v1238 = vpop.f32.mrb[0].mxu0
        %v1239 = vpop.f32.mrb[0].mxu0
        %v1240 = vadd.f32 0.0, %v1239
        %v1241 = vpop.f32.mrb[0].mxu0
        %1242 = vdwg.mxu0
        %v1243 = vmul.f32 %v1237, 0.25
        %v1244 = vmul.f32 %v1240, 0.25
        %v1245 = vsel %vm989, -inf, %v1243
        %v1246 = vsel %vm990, -inf, %v1244
        %v1247 = vsel %vm993, %v1245, -inf
        %1248 = vmax.xlane.f32.xlu0 %v1247
        %v1249 = vpop.xlane.xlu0 %1248
        %v1250 = vsel %vm993, %v1246, -inf
        %1251 = vmax.xlane.f32.xlu0 %v1250
        %v1252 = vpop.xlane.xlu0 %1251
        %v1253 = vsub.f32 %v1245, %v1249
        %v1254 = vsub.f32 %v1246, %v1252
        %v1255 = vmul.f32 %v1253, 1.442695
        %v1256 = vpow.pop %v1255
        %v1257 = vmul.f32 %v1254, 1.442695
        %v1258 = vpow.pop %v1257
        %v1259 = vsel %vm993, %v1256, 0.0
        %1260 = vadd.xlane.f32.xlu0 %v1259
        %v1261 = vpop.xlane.xlu0 %1260
        %v1262 = vsel %vm993, %v1258, 0.0
        %1263 = vadd.xlane.f32.xlu0 %v1262
        %v1264 = vpop.xlane.xlu0 %1263
        %v1265 = vrcp.pop %v1261
        %v1266 = vrcp.pop %v1264
        %v1267 = vmul.f32 %v1256, %v1265
        %v1268 = vmul.f32 %v1258, %v1266
        %v1269 = vpack.c.bf16 %v1268, %v1267
        %v1271 = vsel %vm993, %v1269, 0
        %1273 = vmatprep.subr.bf16.mxu0 0
        %1274 = vmatpush1.bf16.msra.mxu0 %v790
        %1275 = vmatprep.subr.bf16.mxu0 0
        %1276 = vmatpush1.bf16.msra.mxu0 %v791
        %1277 = vmatprep.subr.bf16.mxu0 0
        %1278 = vmatpush1.bf16.msra.mxu0 0
        %1279 = vmatprep.subr.bf16.mxu0 0
        %1280 = vmatpush1.bf16.msra.mxu0 0
        %1281 = vmatprep.subr.bf16.mxu0 0
        %1282 = vmatpush1.bf16.msra.mxu0 0
        %1283 = vmatprep.subr.bf16.mxu0 0
        %1284 = vmatpush1.bf16.msra.mxu0 0
        %1285 = vmatprep.subr.bf16.mxu0 0
        %1286 = vmatpush1.bf16.msra.mxu0 0
        %1287 = vmatprep.subr.bf16.mxu0 0
        %1288 = vmatpush1.bf16.msra.mxu0 0
        %1289 = vmatprep.subr.bf16.mxu0 0
        %1290 = vmatpush1.bf16.msra.mxu0 0
        %1291 = vmatprep.subr.bf16.mxu0 0
        %1292 = vmatpush1.bf16.msra.mxu0 0
        %1293 = vmatprep.subr.bf16.mxu0 0
        %1294 = vmatpush1.bf16.msra.mxu0 0
        %1295 = vmatprep.subr.bf16.mxu0 0
        %1296 = vmatpush1.bf16.msra.mxu0 0
        %1297 = vmatprep.subr.bf16.mxu0 0
        %1298 = vmatpush1.bf16.msra.mxu0 0
        %1299 = vmatprep.subr.bf16.mxu0 0
        %1300 = vmatpush1.bf16.msra.mxu0 0
        %1301 = vmatprep.subr.bf16.mxu0 0
        %1302 = vmatpush1.bf16.msra.mxu0 0
        %1303 = vmatprep.subr.bf16.mxu0 0
        %1304 = vmatpush1.bf16.msra.mxu0 0
        %1305 = vmatprep.mubr.bf16.mxu0 0
        %1306 = vmatmul.mubr.bf16.gmra.mrb[0].mxu0 %v1271
        %v1307 = vpop.f32.mrb[0].mxu0
        %v1308 = vadd.f32 0.0, %v1307
        %v1309 = vpop.f32.mrb[0].mxu0
        %v1310 = vpop.f32.mrb[0].mxu0
        %v1311 = vadd.f32 0.0, %v1310
        %v1312 = vpop.f32.mrb[0].mxu0
        %1313 = vdwg.mxu0
        %s1314 = scalar_lea.vmem %s478, 16
        %v1315 = vld [vmem:[%s1314] sm:$0xf]
        %v1316 = vld [vmem:[%s1314 + $0x4] sm:$0xf]
        %v1319 = vunpack.c.l.b16 %v1315
        %v1320 = vunpack.c.l.b16 %v1316
        %v1321 = vpack.c.b16 %v1320, %v1319
        %1323 = vmatprep.subr.bf16.mxu0 0
        %1324 = vmatpush1.bf16.xpose.msra.mxu0 %v1321
        %1325 = vmatprep.subr.bf16.mxu0 0
        %1326 = vmatpush1.bf16.xpose.msra.mxu0 0
        %1327 = vmatprep.subr.bf16.mxu0 0
        %1328 = vmatpush1.bf16.xpose.msra.mxu0 0
        %1329 = vmatprep.subr.bf16.mxu0 0
        %1330 = vmatpush1.bf16.xpose.msra.mxu0 0
        %1331 = vmatprep.subr.bf16.mxu0 0
        %1332 = vmatpush1.bf16.xpose.msra.mxu0 0
        %1333 = vmatprep.subr.bf16.mxu0 0
        %1334 = vmatpush1.bf16.xpose.msra.mxu0 0
        %1335 = vmatprep.subr.bf16.mxu0 0
        %1336 = vmatpush1.bf16.xpose.msra.mxu0 0
        %1337 = vmatprep.subr.bf16.mxu0 0
        %1338 = vmatpush1.bf16.xpose.msra.mxu0 0
        %1339 = vmatprep.subr.bf16.mxu0 0
        %1340 = vmatpush1.bf16.xpose.msra.mxu0 0
        %1341 = vmatprep.subr.bf16.mxu0 0
        %1342 = vmatpush1.bf16.xpose.msra.mxu0 0
        %1343 = vmatprep.subr.bf16.mxu0 0
        %1344 = vmatpush1.bf16.xpose.msra.mxu0 0
        %1345 = vmatprep.subr.bf16.mxu0 0
        %1346 = vmatpush1.bf16.xpose.msra.mxu0 0
        %1347 = vmatprep.subr.bf16.mxu0 0
        %1348 = vmatpush1.bf16.xpose.msra.mxu0 0
        %1349 = vmatprep.subr.bf16.mxu0 0
        %1350 = vmatpush1.bf16.xpose.msra.mxu0 0
        %1351 = vmatprep.subr.bf16.mxu0 0
        %1352 = vmatpush1.bf16.xpose.msra.mxu0 0
        %1353 = vmatprep.subr.bf16.mxu0 0
        %1354 = vmatpush1.bf16.xpose.msra.mxu0 0
        %1355 = vmatprep.mubr.bf16.mxu0 0
        %1356 = vmatmul.mubr.bf16.gmra.mrb[0].mxu0 %v547
        %v1357 = vpop.f32.mrb[0].mxu0
        %v1358 = vadd.f32 0.0, %v1357
        %v1359 = vpop.f32.mrb[0].mxu0
        %v1360 = vpop.f32.mrb[0].mxu0
        %v1361 = vadd.f32 0.0, %v1360
        %v1362 = vpop.f32.mrb[0].mxu0
        %1363 = vdwg.mxu0
        %v1364 = vmul.f32 %v1358, %v559
        %v1365 = vmul.f32 %v1361, %v560
        %v1367 = vsel %vm682, %v1358, 0
        %v1370 = vsel %vm682, %v1361, 0
        %1372 = vmatprep.subr.mxu0 0.0
        %1373 = vmatpush1.msra.mxu0 %v548
        %1374 = vmatprep.subr.mxu0 0.0
        %1375 = vmatpush1.msra.mxu0 %v549
        %1376 = vmatprep.subr.mxu0 0.0
        %1377 = vmatpush1.msra.mxu0 0.0
        %1378 = vmatprep.subr.mxu0 0.0
        %1379 = vmatpush1.msra.mxu0 0.0
        %1380 = vmatprep.subr.mxu0 0.0
        %1381 = vmatpush1.msra.mxu0 0.0
        %1382 = vmatprep.subr.mxu0 0.0
        %1383 = vmatpush1.msra.mxu0 0.0
        %1384 = vmatprep.subr.mxu0 0.0
        %1385 = vmatpush1.msra.mxu0 0.0
        %1386 = vmatprep.subr.mxu0 0.0
        %1387 = vmatpush1.msra.mxu0 0.0
        %1388 = vmatprep.subr.mxu0 0.0
        %1389 = vmatpush1.msra.mxu0 0.0
        %1390 = vmatprep.subr.mxu0 0.0
        %1391 = vmatpush1.msra.mxu0 0.0
        %1392 = vmatprep.subr.mxu0 0.0
        %1393 = vmatpush1.msra.mxu0 0.0
        %1394 = vmatprep.subr.mxu0 0.0
        %1395 = vmatpush1.msra.mxu0 0.0
        %1396 = vmatprep.subr.mxu0 0.0
        %1397 = vmatpush1.msra.mxu0 0.0
        %1398 = vmatprep.subr.mxu0 0.0
        %1399 = vmatpush1.msra.mxu0 0.0
        %1400 = vmatprep.subr.mxu0 0.0
        %1401 = vmatpush1.msra.mxu0 0.0
        %1402 = vmatprep.subr.mxu0 0.0
        %1403 = vmatpush1.msra.mxu0 0.0
        %1404 = vmatprep.subr.mxu0 0.0
        %1405 = vmatpush1.msra.mxu0 0.0
        %1406 = vmatprep.subr.mxu0 0.0
        %1407 = vmatpush1.msra.mxu0 0.0
        %1408 = vmatprep.subr.mxu0 0.0
        %1409 = vmatpush1.msra.mxu0 0.0
        %1410 = vmatprep.subr.mxu0 0.0
        %1411 = vmatpush1.msra.mxu0 0.0
        %1412 = vmatprep.subr.mxu0 0.0
        %1413 = vmatpush1.msra.mxu0 0.0
        %1414 = vmatprep.subr.mxu0 0.0
        %1415 = vmatpush1.msra.mxu0 0.0
        %1416 = vmatprep.subr.mxu0 0.0
        %1417 = vmatpush1.msra.mxu0 0.0
        %1418 = vmatprep.subr.mxu0 0.0
        %1419 = vmatpush1.msra.mxu0 0.0
        %1420 = vmatprep.subr.mxu0 0.0
        %1421 = vmatpush1.msra.mxu0 0.0
        %1422 = vmatprep.subr.mxu0 0.0
        %1423 = vmatpush1.msra.mxu0 0.0
        %1424 = vmatprep.subr.mxu0 0.0
        %1425 = vmatpush1.msra.mxu0 0.0
        %1426 = vmatprep.subr.mxu0 0.0
        %1427 = vmatpush1.msra.mxu0 0.0
        %1428 = vmatprep.subr.mxu0 0.0
        %1429 = vmatpush1.msra.mxu0 0.0
        %1430 = vmatprep.subr.mxu0 0.0
        %1431 = vmatpush1.msra.mxu0 0.0
        %1432 = vmatprep.subr.mxu0 0.0
        %1433 = vmatpush1.msra.mxu0 0.0
        %1434 = vmatprep.subr.mxu0 0.0
        %1435 = vmatpush1.msra.mxu0 0.0
        %1436 = vmatprep.mubr.f32.mxu0 0.0
        %1437 = vmatmul.mubr.f32.gmra.mrb[0].mxu0 %v1367
        %v1438 = vpop.f32.mrb[0].mxu0
        %v1439 = vadd.f32 0.0, %v1438
        %v1440 = vpop.f32.mrb[0].mxu0
        %1441 = vmatprep.mubr.f32.mxu0 0.0
        %1442 = vmatmul.mubr.f32.gmra.mrb[0].mxu0 %v1370
        %v1443 = vpop.f32.mrb[0].mxu0
        %v1444 = vadd.f32 0.0, %v1443
        %v1445 = vpop.f32.mrb[0].mxu0
        %1446 = vdwg.mxu0
        %v1447 = vmul.f32 %v1439, %v562
        %v1448 = vmul.f32 %v1444, %v563
        %v1449 = vadd.f32 %v1364, %v1447
        %v1450 = vadd.f32 %v1365, %v1448
        %v1451 = vpack.c.bf16 %v1450, %v1449
        %v1453 = vsel %vm682, %v1451, 0
        %1455 = vmatprep.subr.bf16.mxu0 0
        %1456 = vmatpush1.bf16.xpose.msra.mxu0 %v941
        %1457 = vmatprep.subr.bf16.mxu0 0
        %1458 = vmatpush1.bf16.xpose.msra.mxu0 %v944
        %1459 = vmatprep.subr.bf16.mxu0 0
        %1460 = vmatpush1.bf16.xpose.msra.mxu0 0
        %1461 = vmatprep.subr.bf16.mxu0 0
        %1462 = vmatpush1.bf16.xpose.msra.mxu0 0
        %1463 = vmatprep.subr.bf16.mxu0 0
        %1464 = vmatpush1.bf16.xpose.msra.mxu0 0
        %1465 = vmatprep.subr.bf16.mxu0 0
        %1466 = vmatpush1.bf16.xpose.msra.mxu0 0
        %1467 = vmatprep.subr.bf16.mxu0 0
        %1468 = vmatpush1.bf16.xpose.msra.mxu0 0
        %1469 = vmatprep.subr.bf16.mxu0 0
        %1470 = vmatpush1.bf16.xpose.msra.mxu0 0
        %1471 = vmatprep.subr.bf16.mxu0 0
        %1472 = vmatpush1.bf16.xpose.msra.mxu0 0
        %1473 = vmatprep.subr.bf16.mxu0 0
        %1474 = vmatpush1.bf16.xpose.msra.mxu0 0
        %1475 = vmatprep.subr.bf16.mxu0 0
        %1476 = vmatpush1.bf16.xpose.msra.mxu0 0
        %1477 = vmatprep.subr.bf16.mxu0 0
        %1478 = vmatpush1.bf16.xpose.msra.mxu0 0
        %1479 = vmatprep.subr.bf16.mxu0 0
        %1480 = vmatpush1.bf16.xpose.msra.mxu0 0
        %1481 = vmatprep.subr.bf16.mxu0 0
        %1482 = vmatpush1.bf16.xpose.msra.mxu0 0
        %1483 = vmatprep.subr.bf16.mxu0 0
        %1484 = vmatpush1.bf16.xpose.msra.mxu0 0
        %1485 = vmatprep.subr.bf16.mxu0 0
        %1486 = vmatpush1.bf16.xpose.msra.mxu0 0
        %1487 = vmatprep.mubr.bf16.mxu0 0
        %1488 = vmatmul.mubr.bf16.gmra.mrb[0].mxu0 %v1453
        %v1489 = vpop.f32.mrb[0].mxu0
        %v1490 = vadd.f32 0.0, %v1489
        %v1491 = vpop.f32.mrb[0].mxu0
        %v1492 = vpop.f32.mrb[0].mxu0
        %v1493 = vadd.f32 0.0, %v1492
        %v1494 = vpop.f32.mrb[0].mxu0
        %1495 = vdwg.mxu0
        %v1496 = vmul.f32 %v1490, 0.25
        %v1497 = vmul.f32 %v1493, 0.25
        %v1498 = vsel %vm989, -inf, %v1496
        %v1499 = vsel %vm990, -inf, %v1497
        %v1500 = vsel %vm993, %v1498, -inf
        %1501 = vmax.xlane.f32.xlu0 %v1500
        %v1502 = vpop.xlane.xlu0 %1501
        %v1503 = vsel %vm993, %v1499, -inf
        %1504 = vmax.xlane.f32.xlu0 %v1503
        %v1505 = vpop.xlane.xlu0 %1504
        %v1506 = vsub.f32 %v1498, %v1502
        %v1507 = vsub.f32 %v1499, %v1505
        %v1508 = vmul.f32 %v1506, 1.442695
        %v1509 = vpow.pop %v1508
        %v1510 = vmul.f32 %v1507, 1.442695
        %v1511 = vpow.pop %v1510
        %v1512 = vsel %vm993, %v1509, 0.0
        %1513 = vadd.xlane.f32.xlu0 %v1512
        %v1514 = vpop.xlane.xlu0 %1513
        %v1515 = vsel %vm993, %v1511, 0.0
        %1516 = vadd.xlane.f32.xlu0 %v1515
        %v1517 = vpop.xlane.xlu0 %1516
        %v1518 = vrcp.pop %v1514
        %v1519 = vrcp.pop %v1517
        %v1520 = vmul.f32 %v1509, %v1518
        %v1521 = vmul.f32 %v1511, %v1519
        %v1522 = vpack.c.bf16 %v1521, %v1520
        %v1524 = vsel %vm993, %v1522, 0
        %1526 = vmatprep.subr.bf16.mxu0 0
        %1527 = vmatpush1.bf16.msra.mxu0 %v790
        %1528 = vmatprep.subr.bf16.mxu0 0
        %1529 = vmatpush1.bf16.msra.mxu0 %v791
        %1530 = vmatprep.subr.bf16.mxu0 0
        %1531 = vmatpush1.bf16.msra.mxu0 0
        %1532 = vmatprep.subr.bf16.mxu0 0
        %1533 = vmatpush1.bf16.msra.mxu0 0
        %1534 = vmatprep.subr.bf16.mxu0 0
        %1535 = vmatpush1.bf16.msra.mxu0 0
        %1536 = vmatprep.subr.bf16.mxu0 0
        %1537 = vmatpush1.bf16.msra.mxu0 0
        %1538 = vmatprep.subr.bf16.mxu0 0
        %1539 = vmatpush1.bf16.msra.mxu0 0
        %1540 = vmatprep.subr.bf16.mxu0 0
        %1541 = vmatpush1.bf16.msra.mxu0 0
        %1542 = vmatprep.subr.bf16.mxu0 0
        %1543 = vmatpush1.bf16.msra.mxu0 0
        %1544 = vmatprep.subr.bf16.mxu0 0
        %1545 = vmatpush1.bf16.msra.mxu0 0
        %1546 = vmatprep.subr.bf16.mxu0 0
        %1547 = vmatpush1.bf16.msra.mxu0 0
        %1548 = vmatprep.subr.bf16.mxu0 0
        %1549 = vmatpush1.bf16.msra.mxu0 0
        %1550 = vmatprep.subr.bf16.mxu0 0
        %1551 = vmatpush1.bf16.msra.mxu0 0
        %1552 = vmatprep.subr.bf16.mxu0 0
        %1553 = vmatpush1.bf16.msra.mxu0 0
        %1554 = vmatprep.subr.bf16.mxu0 0
        %1555 = vmatpush1.bf16.msra.mxu0 0
        %1556 = vmatprep.subr.bf16.mxu0 0
        %1557 = vmatpush1.bf16.msra.mxu0 0
        %1558 = vmatprep.mubr.bf16.mxu0 0
        %1559 = vmatmul.mubr.bf16.gmra.mrb[0].mxu0 %v1524
        %v1560 = vpop.f32.mrb[0].mxu0
        %v1561 = vadd.f32 0.0, %v1560
        %v1562 = vpop.f32.mrb[0].mxu0
        %v1563 = vpop.f32.mrb[0].mxu0
        %v1564 = vadd.f32 0.0, %v1563
        %v1565 = vpop.f32.mrb[0].mxu0
        %1566 = vdwg.mxu0
        %s1567 = scalar_lea.vmem %s478, 24
        %v1568 = vld [vmem:[%s1567] sm:$0xf]
        %v1569 = vld [vmem:[%s1567 + $0x4] sm:$0xf]
        %v1572 = vunpack.c.l.b16 %v1568
        %v1573 = vunpack.c.l.b16 %v1569
        %v1574 = vpack.c.b16 %v1573, %v1572
        %1576 = vmatprep.subr.bf16.mxu0 0
        %1577 = vmatpush1.bf16.xpose.msra.mxu0 %v1574
        %1578 = vmatprep.subr.bf16.mxu0 0
        %1579 = vmatpush1.bf16.xpose.msra.mxu0 0
        %1580 = vmatprep.subr.bf16.mxu0 0
        %1581 = vmatpush1.bf16.xpose.msra.mxu0 0
        %1582 = vmatprep.subr.bf16.mxu0 0
        %1583 = vmatpush1.bf16.xpose.msra.mxu0 0
        %1584 = vmatprep.subr.bf16.mxu0 0
        %1585 = vmatpush1.bf16.xpose.msra.mxu0 0
        %1586 = vmatprep.subr.bf16.mxu0 0
        %1587 = vmatpush1.bf16.xpose.msra.mxu0 0
        %1588 = vmatprep.subr.bf16.mxu0 0
        %1589 = vmatpush1.bf16.xpose.msra.mxu0 0
        %1590 = vmatprep.subr.bf16.mxu0 0
        %1591 = vmatpush1.bf16.xpose.msra.mxu0 0
        %1592 = vmatprep.subr.bf16.mxu0 0
        %1593 = vmatpush1.bf16.xpose.msra.mxu0 0
        %1594 = vmatprep.subr.bf16.mxu0 0
        %1595 = vmatpush1.bf16.xpose.msra.mxu0 0
        %1596 = vmatprep.subr.bf16.mxu0 0
        %1597 = vmatpush1.bf16.xpose.msra.mxu0 0
        %1598 = vmatprep.subr.bf16.mxu0 0
        %1599 = vmatpush1.bf16.xpose.msra.mxu0 0
        %1600 = vmatprep.subr.bf16.mxu0 0
        %1601 = vmatpush1.bf16.xpose.msra.mxu0 0
        %1602 = vmatprep.subr.bf16.mxu0 0
        %1603 = vmatpush1.bf16.xpose.msra.mxu0 0
        %1604 = vmatprep.subr.bf16.mxu0 0
        %1605 = vmatpush1.bf16.xpose.msra.mxu0 0
        %1606 = vmatprep.subr.bf16.mxu0 0
        %1607 = vmatpush1.bf16.xpose.msra.mxu0 0
        %1608 = vmatprep.mubr.bf16.mxu0 0
        %1609 = vmatmul.mubr.bf16.gmra.mrb[0].mxu0 %v547
        %v1610 = vpop.f32.mrb[0].mxu0
        %v1611 = vadd.f32 0.0, %v1610
        %v1612 = vpop.f32.mrb[0].mxu0
        %v1613 = vpop.f32.mrb[0].mxu0
        %v1614 = vadd.f32 0.0, %v1613
        %v1615 = vpop.f32.mrb[0].mxu0
        %1616 = vdwg.mxu0
        %v1617 = vmul.f32 %v1611, %v559
        %v1618 = vmul.f32 %v1614, %v560
        %v1620 = vsel %vm682, %v1611, 0
        %v1623 = vsel %vm682, %v1614, 0
        %1625 = vmatprep.subr.mxu0 0.0
        %1626 = vmatpush1.msra.mxu0 %v548
        %1627 = vmatprep.subr.mxu0 0.0
        %1628 = vmatpush1.msra.mxu0 %v549
        %1629 = vmatprep.subr.mxu0 0.0
        %1630 = vmatpush1.msra.mxu0 0.0
        %1631 = vmatprep.subr.mxu0 0.0
        %1632 = vmatpush1.msra.mxu0 0.0
        %1633 = vmatprep.subr.mxu0 0.0
        %1634 = vmatpush1.msra.mxu0 0.0
        %1635 = vmatprep.subr.mxu0 0.0
        %1636 = vmatpush1.msra.mxu0 0.0
        %1637 = vmatprep.subr.mxu0 0.0
        %1638 = vmatpush1.msra.mxu0 0.0
        %1639 = vmatprep.subr.mxu0 0.0
        %1640 = vmatpush1.msra.mxu0 0.0
        %1641 = vmatprep.subr.mxu0 0.0
        %1642 = vmatpush1.msra.mxu0 0.0
        %1643 = vmatprep.subr.mxu0 0.0
        %1644 = vmatpush1.msra.mxu0 0.0
        %1645 = vmatprep.subr.mxu0 0.0
        %1646 = vmatpush1.msra.mxu0 0.0
        %1647 = vmatprep.subr.mxu0 0.0
        %1648 = vmatpush1.msra.mxu0 0.0
        %1649 = vmatprep.subr.mxu0 0.0
        %1650 = vmatpush1.msra.mxu0 0.0
        %1651 = vmatprep.subr.mxu0 0.0
        %1652 = vmatpush1.msra.mxu0 0.0
        %1653 = vmatprep.subr.mxu0 0.0
        %1654 = vmatpush1.msra.mxu0 0.0
        %1655 = vmatprep.subr.mxu0 0.0
        %1656 = vmatpush1.msra.mxu0 0.0
        %1657 = vmatprep.subr.mxu0 0.0
        %1658 = vmatpush1.msra.mxu0 0.0
        %1659 = vmatprep.subr.mxu0 0.0
        %1660 = vmatpush1.msra.mxu0 0.0
        %1661 = vmatprep.subr.mxu0 0.0
        %1662 = vmatpush1.msra.mxu0 0.0
        %1663 = vmatprep.subr.mxu0 0.0
        %1664 = vmatpush1.msra.mxu0 0.0
        %1665 = vmatprep.subr.mxu0 0.0
        %1666 = vmatpush1.msra.mxu0 0.0
        %1667 = vmatprep.subr.mxu0 0.0
        %1668 = vmatpush1.msra.mxu0 0.0
        %1669 = vmatprep.subr.mxu0 0.0
        %1670 = vmatpush1.msra.mxu0 0.0
        %1671 = vmatprep.subr.mxu0 0.0
        %1672 = vmatpush1.msra.mxu0 0.0
        %1673 = vmatprep.subr.mxu0 0.0
        %1674 = vmatpush1.msra.mxu0 0.0
        %1675 = vmatprep.subr.mxu0 0.0
        %1676 = vmatpush1.msra.mxu0 0.0
        %1677 = vmatprep.subr.mxu0 0.0
        %1678 = vmatpush1.msra.mxu0 0.0
        %1679 = vmatprep.subr.mxu0 0.0
        %1680 = vmatpush1.msra.mxu0 0.0
        %1681 = vmatprep.subr.mxu0 0.0
        %1682 = vmatpush1.msra.mxu0 0.0
        %1683 = vmatprep.subr.mxu0 0.0
        %1684 = vmatpush1.msra.mxu0 0.0
        %1685 = vmatprep.subr.mxu0 0.0
        %1686 = vmatpush1.msra.mxu0 0.0
        %1687 = vmatprep.subr.mxu0 0.0
        %1688 = vmatpush1.msra.mxu0 0.0
        %1689 = vmatprep.mubr.f32.mxu0 0.0
        %1690 = vmatmul.mubr.f32.gmra.mrb[0].mxu0 %v1620
        %v1691 = vpop.f32.mrb[0].mxu0
        %v1692 = vadd.f32 0.0, %v1691
        %v1693 = vpop.f32.mrb[0].mxu0
        %1694 = vmatprep.mubr.f32.mxu0 0.0
        %1695 = vmatmul.mubr.f32.gmra.mrb[0].mxu0 %v1623
        %v1696 = vpop.f32.mrb[0].mxu0
        %v1697 = vadd.f32 0.0, %v1696
        %v1698 = vpop.f32.mrb[0].mxu0
        %1699 = vdwg.mxu0
        %v1700 = vmul.f32 %v1692, %v562
        %v1701 = vmul.f32 %v1697, %v563
        %v1702 = vadd.f32 %v1617, %v1700
        %v1703 = vadd.f32 %v1618, %v1701
        %v1704 = vpack.c.bf16 %v1703, %v1702
        %v1706 = vsel %vm682, %v1704, 0
        %1708 = vmatprep.subr.bf16.mxu0 0
        %1709 = vmatpush1.bf16.xpose.msra.mxu0 %v941
        %1710 = vmatprep.subr.bf16.mxu0 0
        %1711 = vmatpush1.bf16.xpose.msra.mxu0 %v944
        %1712 = vmatprep.subr.bf16.mxu0 0
        %1713 = vmatpush1.bf16.xpose.msra.mxu0 0
        %1714 = vmatprep.subr.bf16.mxu0 0
        %1715 = vmatpush1.bf16.xpose.msra.mxu0 0
        %1716 = vmatprep.subr.bf16.mxu0 0
        %1717 = vmatpush1.bf16.xpose.msra.mxu0 0
        %1718 = vmatprep.subr.bf16.mxu0 0
        %1719 = vmatpush1.bf16.xpose.msra.mxu0 0
        %1720 = vmatprep.subr.bf16.mxu0 0
        %1721 = vmatpush1.bf16.xpose.msra.mxu0 0
        %1722 = vmatprep.subr.bf16.mxu0 0
        %1723 = vmatpush1.bf16.xpose.msra.mxu0 0
        %1724 = vmatprep.subr.bf16.mxu0 0
        %1725 = vmatpush1.bf16.xpose.msra.mxu0 0
        %1726 = vmatprep.subr.bf16.mxu0 0
        %1727 = vmatpush1.bf16.xpose.msra.mxu0 0
        %1728 = vmatprep.subr.bf16.mxu0 0
        %1729 = vmatpush1.bf16.xpose.msra.mxu0 0
        %1730 = vmatprep.subr.bf16.mxu0 0
        %1731 = vmatpush1.bf16.xpose.msra.mxu0 0
        %1732 = vmatprep.subr.bf16.mxu0 0
        %1733 = vmatpush1.bf16.xpose.msra.mxu0 0
        %1734 = vmatprep.subr.bf16.mxu0 0
        %1735 = vmatpush1.bf16.xpose.msra.mxu0 0
        %1736 = vmatprep.subr.bf16.mxu0 0
        %1737 = vmatpush1.bf16.xpose.msra.mxu0 0
        %1738 = vmatprep.subr.bf16.mxu0 0
        %1739 = vmatpush1.bf16.xpose.msra.mxu0 0
        %1740 = vmatprep.mubr.bf16.mxu0 0
        %1741 = vmatmul.mubr.bf16.gmra.mrb[0].mxu0 %v1706
        %v1742 = vpop.f32.mrb[0].mxu0
        %v1743 = vadd.f32 0.0, %v1742
        %v1744 = vpop.f32.mrb[0].mxu0
        %v1745 = vpop.f32.mrb[0].mxu0
        %v1746 = vadd.f32 0.0, %v1745
        %v1747 = vpop.f32.mrb[0].mxu0
        %1748 = vdwg.mxu0
        %v1749 = vmul.f32 %v1743, 0.25
        %v1750 = vmul.f32 %v1746, 0.25
        %v1751 = vsel %vm989, -inf, %v1749
        %v1752 = vsel %vm990, -inf, %v1750
        %v1753 = vsel %vm993, %v1751, -inf
        %1754 = vmax.xlane.f32.xlu0 %v1753
        %v1755 = vpop.xlane.xlu0 %1754
        %v1756 = vsel %vm993, %v1752, -inf
        %1757 = vmax.xlane.f32.xlu0 %v1756
        %v1758 = vpop.xlane.xlu0 %1757
        %v1759 = vsub.f32 %v1751, %v1755
        %v1760 = vsub.f32 %v1752, %v1758
        %v1761 = vmul.f32 %v1759, 1.442695
        %v1762 = vpow.pop %v1761
        %v1763 = vmul.f32 %v1760, 1.442695
        %v1764 = vpow.pop %v1763
        %v1765 = vsel %vm993, %v1762, 0.0
        %1766 = vadd.xlane.f32.xlu0 %v1765
        %v1767 = vpop.xlane.xlu0 %1766
        %v1768 = vsel %vm993, %v1764, 0.0
        %1769 = vadd.xlane.f32.xlu0 %v1768
        %v1770 = vpop.xlane.xlu0 %1769
        %v1771 = vrcp.pop %v1767
        %v1772 = vrcp.pop %v1770
        %v1773 = vmul.f32 %v1762, %v1771
        %v1774 = vmul.f32 %v1764, %v1772
        %v1775 = vpack.c.bf16 %v1774, %v1773
        %v1777 = vsel %vm993, %v1775, 0
        %1779 = vmatprep.subr.bf16.mxu0 0
        %1780 = vmatpush1.bf16.msra.mxu0 %v790
        %1781 = vmatprep.subr.bf16.mxu0 0
        %1782 = vmatpush1.bf16.msra.mxu0 %v791
        %1783 = vmatprep.subr.bf16.mxu0 0
        %1784 = vmatpush1.bf16.msra.mxu0 0
        %1785 = vmatprep.subr.bf16.mxu0 0
        %1786 = vmatpush1.bf16.msra.mxu0 0
        %1787 = vmatprep.subr.bf16.mxu0 0
        %1788 = vmatpush1.bf16.msra.mxu0 0
        %1789 = vmatprep.subr.bf16.mxu0 0
        %1790 = vmatpush1.bf16.msra.mxu0 0
        %1791 = vmatprep.subr.bf16.mxu0 0
        %1792 = vmatpush1.bf16.msra.mxu0 0
        %1793 = vmatprep.subr.bf16.mxu0 0
        %1794 = vmatpush1.bf16.msra.mxu0 0
        %1795 = vmatprep.subr.bf16.mxu0 0
        %1796 = vmatpush1.bf16.msra.mxu0 0
        %1797 = vmatprep.subr.bf16.mxu0 0
        %1798 = vmatpush1.bf16.msra.mxu0 0
        %1799 = vmatprep.subr.bf16.mxu0 0
        %1800 = vmatpush1.bf16.msra.mxu0 0
        %1801 = vmatprep.subr.bf16.mxu0 0
        %1802 = vmatpush1.bf16.msra.mxu0 0
        %1803 = vmatprep.subr.bf16.mxu0 0
        %1804 = vmatpush1.bf16.msra.mxu0 0
        %1805 = vmatprep.subr.bf16.mxu0 0
        %1806 = vmatpush1.bf16.msra.mxu0 0
        %1807 = vmatprep.subr.bf16.mxu0 0
        %1808 = vmatpush1.bf16.msra.mxu0 0
        %1809 = vmatprep.subr.bf16.mxu0 0
        %1810 = vmatpush1.bf16.msra.mxu0 0
        %1811 = vmatprep.mubr.bf16.mxu0 0
        %1812 = vmatmul.mubr.bf16.gmra.mrb[0].mxu0 %v1777
        %v1813 = vpop.f32.mrb[0].mxu0
        %v1814 = vadd.f32 0.0, %v1813
        %v1815 = vpop.f32.mrb[0].mxu0
        %v1816 = vpop.f32.mrb[0].mxu0
        %v1817 = vadd.f32 0.0, %v1816
        %v1818 = vpop.f32.mrb[0].mxu0
        %1819 = vdwg.mxu0
        %1822 = vrot.lane.b32.xlu0 %v1308, 16
        %v1823 = vpop.permute.xlu0 %1822
        %1824 = vrot.lane.b32.xlu0 %v1311, 16
        %v1825 = vpop.permute.xlu0 %1824
        %1830 = vrot.lane.b32.xlu0 %v1561, 32
        %v1831 = vpop.permute.xlu0 %1830
        %1832 = vrot.lane.b32.xlu0 %v1564, 32
        %v1833 = vpop.permute.xlu0 %1832
        %1838 = vrot.lane.b32.xlu0 %v1814, 48
        %v1839 = vpop.permute.xlu0 %1838
        %1840 = vrot.lane.b32.xlu0 %v1817, 48
        %v1841 = vpop.permute.xlu0 %1840
        %v1844 = vsel %vm682, %v1055, %v1823
        %v1845 = vsel %vm682, %v1058, %v1825
        %v1846 = vsel %vm993, %v1844, %v1831
        %v1847 = vsel %vm993, %v1845, %v1833
        %vm1848 = vcmask 392192
        %v1849 = vsel %vm1848, %v1846, %v1839
        %v1850 = vsel %vm1848, %v1847, %v1841
        %v1851 = vpack.c.bf16 %v1850, %v1849
        %v1852 = vld [vmem:[#allocation3] sm:$0xff]
        %v1853 = vld [vmem:[#allocation3 + $0x8] sm:$0xff]
        %v1854 = vld [vmem:[%s418] sm:$0xf]
        %v1855 = vld [vmem:[%s418 + $0x4] sm:$0xf]
        %v1856 = vld [vmem:[%s418 + $0x8] sm:$0xf]
        %v1857 = vld [vmem:[%s418 + $0xc] sm:$0xf]
        %v1858 = vld [vmem:[%s418 + $0x10] sm:$0xf]
        %v1859 = vld [vmem:[%s418 + $0x14] sm:$0xf]
        %v1860 = vld [vmem:[%s418 + $0x18] sm:$0xf]
        %v1861 = vld [vmem:[%s418 + $0x1c] sm:$0xf]
        %v1870 = vunpack.c.l.b16 %v1854
        %v1871 = vunpack.c.l.b16 %v1855
        %v1872 = vunpack.c.l.b16 %v1856
        %v1873 = vunpack.c.l.b16 %v1857
        %v1874 = vunpack.c.l.b16 %v1858
        %v1875 = vunpack.c.l.b16 %v1859
        %v1876 = vunpack.c.l.b16 %v1860
        %v1877 = vunpack.c.l.b16 %v1861
        %v1878 = vpack.c.b16 %v1871, %v1870
        %v1879 = vpack.c.b16 %v1873, %v1872
        %v1880 = vpack.c.b16 %v1875, %v1874
        %v1881 = vpack.c.b16 %v1877, %v1876
        %vm1886 = vcmask 523264
        %v1888 = vsel %vm1886, %v1851, 0
        %1890 = vmatprep.subr.bf16.mxu0 0
        %1891 = vmatpush1.bf16.msra.mxu0 %v1878
        %1892 = vmatprep.subr.bf16.mxu0 0
        %1893 = vmatpush1.bf16.msra.mxu0 %v1879
        %1894 = vmatprep.subr.bf16.mxu0 0
        %1895 = vmatpush1.bf16.msra.mxu0 %v1880
        %1896 = vmatprep.subr.bf16.mxu0 0
        %1897 = vmatpush1.bf16.msra.mxu0 %v1881
        %1898 = vmatprep.subr.bf16.mxu0 0
        %1899 = vmatpush1.bf16.msra.mxu0 0
        %1900 = vmatprep.subr.bf16.mxu0 0
        %1901 = vmatpush1.bf16.msra.mxu0 0
        %1902 = vmatprep.subr.bf16.mxu0 0
        %1903 = vmatpush1.bf16.msra.mxu0 0
        %1904 = vmatprep.subr.bf16.mxu0 0
        %1905 = vmatpush1.bf16.msra.mxu0 0
        %1906 = vmatprep.subr.bf16.mxu0 0
        %1907 = vmatpush1.bf16.msra.mxu0 0
        %1908 = vmatprep.subr.bf16.mxu0 0
        %1909 = vmatpush1.bf16.msra.mxu0 0
        %1910 = vmatprep.subr.bf16.mxu0 0
        %1911 = vmatpush1.bf16.msra.mxu0 0
        %1912 = vmatprep.subr.bf16.mxu0 0
        %1913 = vmatpush1.bf16.msra.mxu0 0
        %1914 = vmatprep.subr.bf16.mxu0 0
        %1915 = vmatpush1.bf16.msra.mxu0 0
        %1916 = vmatprep.subr.bf16.mxu0 0
        %1917 = vmatpush1.bf16.msra.mxu0 0
        %1918 = vmatprep.subr.bf16.mxu0 0
        %1919 = vmatpush1.bf16.msra.mxu0 0
        %1920 = vmatprep.subr.bf16.mxu0 0
        %1921 = vmatpush1.bf16.msra.mxu0 0
        %1922 = vmatprep.mubr.bf16.mxu0 0
        %1923 = vmatmul.mubr.bf16.gmra.mrb[0].mxu0 %v1888
        %v1924 = vpop.f32.mrb[0].mxu0
        %v1925 = vadd.f32 0.0, %v1924
        %v1926 = vpop.f32.mrb[0].mxu0
        %v1927 = vpop.f32.mrb[0].mxu0
        %v1928 = vadd.f32 0.0, %v1927
        %v1929 = vpop.f32.mrb[0].mxu0
        %1930 = vdwg.mxu0
        %v1931 = vadd.f32 %v1852, %v1925
        %v1932 = vadd.f32 %v1853, %v1928
        %1933 = vst [vmem:[#allocation3] sm:$0xff] %v1931
        %1934 = vst [vmem:[#allocation3 + $0x8] sm:$0xff] %v1932
        %p1935 = scmp.eq.s32.totalorder %s35, 1
        // Predicated region
        $region77: #{tpu_custom_call.1} parent=55 // pred_check
          %p1936 = pneg %p1935
        $region78: #{tpu_custom_call.1} parent=55 // pred_check_branch
          %1938 = sbr.rel (%p1936) target = $region80
        $region79: #{tpu_custom_call.1} parent=55 // pred_region
          %v1939 = vld [vmem:[#allocation3] sm:$0xff]
          %v1940 = vld [vmem:[#allocation3 + $0x8] sm:$0xff]
          %1941 = vst [vmem:[%s472] sm:$0xff] %v1939
          %1942 = vst [vmem:[%s472 + $0x8] sm:$0xff] %v1940
        $region80: #{tpu_custom_call.1} parent=55 // pred_fallthru
          _
        %s1943 = sand.u32 %s259, 1
        %s1944 = scalar_lea.sflag [#allocation6], %s1943
        %s1945 = sand.u32 %s259, 1
        %s1946 = smul.addr %s1945, 16
        %s1947 = scalar_lea.vmem [#allocation12], %s1946
        // Predicated region
        $region81: #{tpu_custom_call.1} parent=55 // pred_check
          %p1948 = pneg %p269
        $region82: #{tpu_custom_call.1} parent=55 // pred_check_branch
          %1950 = sbr.rel (%p1948) target = $region84
        $region83: #{tpu_custom_call.1} parent=55 // pred_region
          %s1951 = smul.u32 2, %s34
          %s1953 = ssub.s32 256, 256
          %1954 = vsyncadd %s1944, %s1953
          %s1955 = smul.addr %s1951, 128
          %s1956 = scalar_lea.hbm %s9, %s1955
          %s1957 = sshll.u32 %s1947, 4
          %s1958 = int_to_ptr.vmem [resolvable:$true] %s1957
          %1963 = dma.vmem_to_hbm [thread:$0]  %s1958, 256, %s1956, %s1944, 128, 128, 8
        $region84: #{tpu_custom_call.1} parent=55 // pred_fallthru
          _
      $region56: #{tpu_custom_call.1} parent=5 // pred_fallthru
        _
      %p1964 = scmp.le.s32.totalorder 2, %s25
      // Predicated region
      $region85: #{tpu_custom_call.1} parent=5 // pred_check
        %p1965 = pneg %p1964
      $region86: #{tpu_custom_call.1} parent=5 // pred_check_branch
        %1967 = sbr.rel (%p1965) target = $region88
      $region87: #{tpu_custom_call.1} parent=5 // pred_region
        %s1968 = ssub.s32 %s25, 2
        // Predicated region
        $region89: #{tpu_custom_call.1} parent=87 // pred_check
          %p1969 = pneg %p275
        $region90: #{tpu_custom_call.1} parent=87 // pred_check_branch
          %1971 = sbr.rel (%p1969) target = $region92
        $region91: #{tpu_custom_call.1} parent=87 // pred_region
          %s1972 = sand.u32 %s260, 1
          %s1973 = scalar_lea.sflag [#allocation6], %s1972
          %s1974 = sand.u32 %s260, 1
          %s1975 = smul.addr %s1974, 16
          %s1976 = scalar_lea.vmem [#allocation12], %s1975
          %1977 = dma.done %s1973, 256
        $region92: #{tpu_custom_call.1} parent=87 // pred_fallthru
          _
      $region88: #{tpu_custom_call.1} parent=5 // pred_fallthru
        _
    $region6: #{tpu_custom_call.1} parent=1 // loop_footer
      %s29 = sadd.s32 1, %s25
    $region7: #{tpu_custom_call.1} parent=1 // loop_footer_branch
      %24 = sbr.rel target = $region3
    $region8: #{tpu_custom_call.1} parent=1 // loop_exit
      _
    %1978 = vsyncpa [#allocation5], 1
    %s1979 = scalar_lea.sflag [#allocation5], 1
    %1980 = vsyncpa %s1979, 1
    %1981 = vsyncpa [#allocation8], 1
    %s1982 = scalar_lea.sflag [#allocation8], 1
    %1983 = vsyncpa %s1982, 1
    %1984 = vsyncpa [#allocation11], 1
    %1985 = vsyncpa [#allocation6], 1
    %s1986 = scalar_lea.sflag [#allocation6], 1
    %1987 = vsyncpa %s1986, 1

</llo_original>
